<compile_context>
chip_gen: v5e
topology: v5e:2x2
jax: 0.10.0
libtpu: 0.0.40
codegen_flags: <defaults>
</compile_context>

<pallas_src>
import math

import jax
import jax.numpy as jnp
from jax.experimental import pallas as pl
from jax.experimental.pallas import tpu as pltpu


def _layernorm(x, gamma, beta, eps=1e-5):
    mu = jnp.mean(x, axis=-1, keepdims=True)
    var = jnp.mean((x - mu) ** 2, axis=-1, keepdims=True)
    return (x - mu) * jax.lax.rsqrt(var + eps) * gamma + beta


def _gelu_exact(x):
    # nn.GELU() default (approximate='none'): 0.5 * x * (1 + erf(x / sqrt(2)))
    return 0.5 * x * (1.0 + jax.lax.erf(x * (1.0 / math.sqrt(2.0))))


def _make_kernel(n_head, head_dim, compute_dtype):
    H, Dh = n_head, head_dim

    def kernel(x_ref, wqkv_ref, bqkv_ref, wo_ref, bo_ref,
               g0_ref, be0_ref, w1_ref, b1_ref, w2_ref, b2_ref,
               g1_ref, be1_ref, o_ref):
        Bt, N, E = x_ref.shape
        R = Bt * N

        x32 = x_ref[...].astype(jnp.float32).reshape(R, E)     # residual path (f32)
        xc = x32.astype(compute_dtype)

        # ---- fused QKV projection: one wide (R, 3E) matmul on the MXU ----
        # (1/sqrt(head_dim) is already folded into the Q columns/bias by the wrapper)
        qkv = jnp.dot(xc, wqkv_ref[...], preferred_element_type=jnp.float32)
        qkv = qkv + bqkv_ref[...]                               # (R, 3E) f32

        def head_major(base):
            # gather per-head lane slices into a single (H*Bt, N, Dh) batch
            cols = [qkv[:, base + h * Dh: base + (h + 1) * Dh] for h in range(H)]
            t = jnp.stack(cols, axis=0)                          # (H, R, Dh)
            return t.reshape(H * Bt, N, Dh).astype(compute_dtype)

        qh = head_major(0)
        kh = head_major(E)
        vh = head_major(2 * E)

        # ---- attention, batched over all (head, batch-row) pairs ----
        s = jnp.einsum('gnd,gmd->gnm', qh, kh,
                       preferred_element_type=jnp.float32)       # (G, N, N)
        s = s - jnp.max(s, axis=-1, keepdims=True)
        p = jnp.exp(s)
        p = p * pl.reciprocal(jnp.sum(p, axis=-1, keepdims=True), approx=True)
        o = jnp.einsum('gnm,gmd->gnd', p.astype(compute_dtype), vh,
                       preferred_element_type=jnp.float32)       # (G, N, Dh)

        # ---- head-merge fused into the output projection ----
        #   concat_h(o_h) @ Wo^T  ==  sum_h  o_h @ Wo^T[h*Dh:(h+1)*Dh, :]
        o = o.reshape(H, R, Dh).astype(compute_dtype)
        attn = jnp.einsum('hrd,hde->hre', o, wo_ref[...],
                          preferred_element_type=jnp.float32)    # (H, R, E)
        attn = jnp.sum(attn, axis=0) + bo_ref[...]               # (R, E)

        # ---- residual + LayerNorm0 ----
        y = _layernorm(x32 + attn, g0_ref[...], be0_ref[...])

        # ---- MLP (Linear -> exact GELU -> Linear) + residual + LayerNorm1 ----
        h1 = jnp.dot(y.astype(compute_dtype), w1_ref[...],
                     preferred_element_type=jnp.float32) + b1_ref[...]
        h1 = _gelu_exact(h1)
        m = jnp.dot(h1.astype(compute_dtype), w2_ref[...],
                    preferred_element_type=jnp.float32) + b2_ref[...]
        y = _layernorm(y + m, g1_ref[...], be1_ref[...])

        o_ref[...] = y.reshape(Bt, N, E).astype(o_ref.dtype)

    return kernel


def self_attention_block_pallas(x, params, n_head, *, block_b=1,
                                compute_dtype=jnp.bfloat16):
    B, N, E = x.shape
    M = params["w1T"].shape[1]
    assert E % n_head == 0, "embedding_dim must be divisible by n_head"
    Dh = E // n_head
    assert N % 8 == 0, "sequence length must be a multiple of 8 (sublane tile)"
    assert E % 128 == 0 and M % 128 == 0, "E and mlp_dim must be lane-dense (x128)"
    assert B % block_b == 0

    scale = 1.0 / math.sqrt(Dh)
    cdt = compute_dtype

    # ---- one-time weight preprocessing (plain JAX, outside the kernel) ----
    # fuse Q/K/V into a single (E, 3E) matmul, fold the softmax scale into Q,
    # pre-split the output projection per head so the kernel can fuse the
    # head-merge into a batched matmul + sum.
    wqkv = jnp.concatenate(
        [params["wqT"] * scale, params["wkT"], params["wvT"]], axis=1).astype(cdt)
    bqkv = jnp.concatenate(
        [params["bq"] * scale, params["bk"], params["bv"]], axis=1).astype(jnp.float32)
    wo_heads = params["woT"].reshape(n_head, Dh, E).astype(cdt)

    weight_args = [
        wqkv, bqkv,
        wo_heads, params["bo"].astype(jnp.float32),
        params["g0"].astype(jnp.float32), params["be0"].astype(jnp.float32),
        params["w1T"].astype(cdt), params["b1"].astype(jnp.float32),
        params["w2T"].astype(cdt), params["b2"].astype(jnp.float32),
        params["g1"].astype(jnp.float32), params["be1"].astype(jnp.float32),
    ]

    kernel = _make_kernel(n_head, Dh, cdt)

    def rep_spec(a):
        shape = a.shape
        return pl.BlockSpec(shape, lambda b: (0,) * len(shape))

    in_specs = [pl.BlockSpec((block_b, N, E), lambda b: (b, 0, 0))]
    in_specs += [rep_spec(a) for a in weight_args]

    return pl.pallas_call(
        kernel,
        out_shape=jax.ShapeDtypeStruct((B, N, E), x.dtype),
        grid=(B // block_b,),
        in_specs=in_specs,
        out_specs=pl.BlockSpec((block_b, N, E), lambda b: (b, 0, 0)),
        compiler_params=pltpu.CompilerParams(
            dimension_semantics=("parallel",)),
    )(x, *weight_args)


def self_attention_block_ref(x, params, n_head):
    """Pure-JAX f32 reference for correctness checking."""
    B, N, E = x.shape
    head_dim = E // n_head
    scale = 1.0 / math.sqrt(head_dim)

    q = x @ params["wqT"] + params["bq"]
    k = x @ params["wkT"] + params["bk"]
    v = x @ params["wvT"] + params["bv"]

    def split_heads(t):
        return t.reshape(B, N, n_head, head_dim).transpose(0, 2, 1, 3)

    qh, kh, vh = map(split_heads, (q, k, v))
    s = jnp.einsum("bhqd,bhkd->bhqk", qh, kh) * scale
    p = jax.nn.softmax(s, axis=-1)
    o = jnp.einsum("bhqk,bhkd->bhqd", p, vh)
    o = o.transpose(0, 2, 1, 3).reshape(B, N, E)
    attn = o @ params["woT"] + params["bo"]

    def ln(t, g, b):
        mu = t.mean(-1, keepdims=True)
        var = ((t - mu) ** 2).mean(-1, keepdims=True)
        return (t - mu) / jnp.sqrt(var + 1e-5) * g + b

    y = ln(x + attn, params["g0"], params["be0"])
    h1 = jax.nn.gelu(y @ params["w1T"] + params["b1"], approximate=False)
    m = h1 @ params["w2T"] + params["b2"]
    y = ln(y + m, params["g1"], params["be1"])
    return y


def init_params(key, embedding_dim, mlp_dim):
    E, M = embedding_dim, mlp_dim
    ks = jax.random.split(key, 12)
    w = lambda k, shape: (jax.random.normal(k, shape, jnp.float32) * 0.05)
    return {
        # MultiheadAttention in_proj (stored pre-transposed: y = x @ W^T)
        "wqT": w(ks[0], (E, E)), "wkT": w(ks[1], (E, E)), "wvT": w(ks[2], (E, E)),
        "bq": w(ks[3], (1, E)), "bk": w(ks[4], (1, E)), "bv": w(ks[5], (1, E)),
        # out_proj
        "woT": w(ks[6], (E, E)), "bo": w(ks[7], (1, E)),
        # norm0
        "g0": jnp.ones((1, E), jnp.float32), "be0": jnp.zeros((1, E), jnp.float32),
        # MLPBlock: lin1 (E -> M), lin2 (M -> E)
        "w1T": w(ks[8], (E, M)), "b1": w(ks[9], (1, M)),
        "w2T": w(ks[10], (M, E)), "b2": w(ks[11], (1, E)),
        # norm1
        "g1": jnp.ones((1, E), jnp.float32), "be1": jnp.zeros((1, E), jnp.float32),
    }


if __name__ == "__main__":
    # lane-dense demo shapes: E, mlp_dim multiples of 128; N multiple of 8
    B, N, E = 4, 8, 128
    n_head = 4
    mlp_dim = 2 * E  # default(mlp_dim, embedding_dim * 2)

    key = jax.random.PRNGKey(0)
    kx, kpe, kp = jax.random.split(key, 3)
    query = jax.random.normal(kx, (B, N, E), jnp.float32)
    query_pe = jax.random.normal(kpe, (B, N, E), jnp.float32)
    params = init_params(kp, E, mlp_dim)

    # query_pe addition is cheap glue; done in plain JAX before the kernel.
    x = query + query_pe
    ref = self_attention_block_ref(x, params, n_head)

    # 1) f32 compute path (only approx-reciprocal differs from the reference)
    out_f32 = self_attention_block_pallas(
        x, params, n_head, block_b=2, compute_dtype=jnp.float32)
    out_f32 = jax.block_until_ready(out_f32)
    assert out_f32.shape == (B, N, E)
    err32 = jnp.max(jnp.abs(out_f32 - ref))
    assert jnp.allclose(out_f32, ref, atol=3e-3, rtol=3e-3), f"f32 max err={err32}"

    # 2) bf16 MXU path (f32 accumulation; softmax/LayerNorm in f32)
    out_bf16 = self_attention_block_pallas(
        x, params, n_head, block_b=2, compute_dtype=jnp.bfloat16)
    out_bf16 = jax.block_until_ready(out_bf16)
    assert out_bf16.shape == (B, N, E)
    err16 = jnp.max(jnp.abs(out_bf16 - ref))
    assert jnp.allclose(out_bf16, ref, atol=6e-2, rtol=6e-2), f"bf16 max err={err16}"

    print("KERNEL_OK")
</pallas_src>

<mosaic_0001>
module attributes {stable_mosaic.version = 11 : i64} {
  func.func @kernel(%arg0: i32, %arg1: memref<2x8x128xf32, #tpu.memory_space<vmem>>, %arg2: memref<128x384xf32, #tpu.memory_space<vmem>>, %arg3: memref<1x384xf32, #tpu.memory_space<vmem>>, %arg4: memref<4x32x128xf32, #tpu.memory_space<vmem>>, %arg5: memref<1x128xf32, #tpu.memory_space<vmem>>, %arg6: memref<1x128xf32, #tpu.memory_space<vmem>>, %arg7: memref<1x128xf32, #tpu.memory_space<vmem>>, %arg8: memref<128x256xf32, #tpu.memory_space<vmem>>, %arg9: memref<1x256xf32, #tpu.memory_space<vmem>>, %arg10: memref<256x128xf32, #tpu.memory_space<vmem>>, %arg11: memref<1x128xf32, #tpu.memory_space<vmem>>, %arg12: memref<1x128xf32, #tpu.memory_space<vmem>>, %arg13: memref<1x128xf32, #tpu.memory_space<vmem>>, %arg14: memref<2x8x128xf32, #tpu.memory_space<vmem>>) attributes {dimension_semantics = [#tpu.dimension_semantics<parallel>], iteration_bounds = array<i64: 2>, scalar_prefetch = 0 : i64, scratch_operands = 0 : i64, tpu.core_type = #tpu.core_type<tc>, window_params = [{transform_indices = @transform_0, window_bounds = array<i64: 2, 8, 128>}, {pipeline_mode = #tpu.pipeline_mode<synchronous>, transform_indices = @transform_1, window_bounds = array<i64: 128, 384>}, {pipeline_mode = #tpu.pipeline_mode<synchronous>, transform_indices = @transform_2, window_bounds = array<i64: 1, 384>}, {pipeline_mode = #tpu.pipeline_mode<synchronous>, transform_indices = @transform_3, window_bounds = array<i64: 4, 32, 128>}, {pipeline_mode = #tpu.pipeline_mode<synchronous>, transform_indices = @transform_4, window_bounds = array<i64: 1, 128>}, {pipeline_mode = #tpu.pipeline_mode<synchronous>, transform_indices = @transform_5, window_bounds = array<i64: 1, 128>}, {pipeline_mode = #tpu.pipeline_mode<synchronous>, transform_indices = @transform_6, window_bounds = array<i64: 1, 128>}, {pipeline_mode = #tpu.pipeline_mode<synchronous>, transform_indices = @transform_7, window_bounds = array<i64: 128, 256>}, {pipeline_mode = #tpu.pipeline_mode<synchronous>, transform_indices = @transform_8, window_bounds = array<i64: 1, 256>}, {pipeline_mode = #tpu.pipeline_mode<synchronous>, transform_indices = @transform_9, window_bounds = array<i64: 256, 128>}, {pipeline_mode = #tpu.pipeline_mode<synchronous>, transform_indices = @transform_10, window_bounds = array<i64: 1, 128>}, {pipeline_mode = #tpu.pipeline_mode<synchronous>, transform_indices = @transform_11, window_bounds = array<i64: 1, 128>}, {pipeline_mode = #tpu.pipeline_mode<synchronous>, transform_indices = @transform_12, window_bounds = array<i64: 1, 128>}, {transform_indices = @transform_13, window_bounds = array<i64: 2, 8, 128>}]} {
    %c0 = arith.constant 0 : index
    %c0_0 = arith.constant 0 : index
    %c0_1 = arith.constant 0 : index
    %0 = vector.load %arg1[%c0, %c0_0, %c0_1] : memref<2x8x128xf32, #tpu.memory_space<vmem>>, vector<2x8x128xf32>
    %1 = vector.shape_cast %0 : vector<2x8x128xf32> to vector<16x128xf32>
    %c0_2 = arith.constant 0 : index
    %c0_3 = arith.constant 0 : index
    %2 = vector.load %arg2[%c0_2, %c0_3] : memref<128x384xf32, #tpu.memory_space<vmem>>, vector<128x384xf32>
    %cst = arith.constant dense<0.000000e+00> : vector<16x384xf32>
    %3 = tpu.matmul %1, %2, %cst {dimension_numbers = #tpu.dot_dimension_numbers<[1], [0], [0], [1], [0, 0, 1, 1], [], []>} : vector<16x128xf32>, vector<128x384xf32>, vector<16x384xf32> -> vector<16x384xf32>
    %c0_4 = arith.constant 0 : index
    %c0_5 = arith.constant 0 : index
    %4 = vector.load %arg3[%c0_4, %c0_5] : memref<1x384xf32, #tpu.memory_space<vmem>>, vector<1x384xf32>
    %5 = vector.broadcast %4 : vector<1x384xf32> to vector<16x384xf32>
    %6 = arith.addf %3, %5 : vector<16x384xf32>
    %7 = vector.extract_strided_slice %6 {offsets = [0, 0], sizes = [16, 32], strides = [1, 1]} : vector<16x384xf32> to vector<16x32xf32>
    %8 = vector.extract_strided_slice %6 {offsets = [0, 32], sizes = [16, 32], strides = [1, 1]} : vector<16x384xf32> to vector<16x32xf32>
    %9 = vector.extract_strided_slice %6 {offsets = [0, 64], sizes = [16, 32], strides = [1, 1]} : vector<16x384xf32> to vector<16x32xf32>
    %10 = vector.extract_strided_slice %6 {offsets = [0, 96], sizes = [16, 32], strides = [1, 1]} : vector<16x384xf32> to vector<16x32xf32>
    %11 = vector.shape_cast %7 : vector<16x32xf32> to vector<1x16x32xf32>
    %12 = vector.shape_cast %8 : vector<16x32xf32> to vector<1x16x32xf32>
    %13 = vector.shape_cast %9 : vector<16x32xf32> to vector<1x16x32xf32>
    %14 = vector.shape_cast %10 : vector<16x32xf32> to vector<1x16x32xf32>
    %15 = tpu.concatenate %11, %12, %13, %14 in 0 : vector<1x16x32xf32>, vector<1x16x32xf32>, vector<1x16x32xf32>, vector<1x16x32xf32> -> vector<4x16x32xf32>
    %16 = vector.shape_cast %15 : vector<4x16x32xf32> to vector<8x8x32xf32>
    %17 = vector.extract_strided_slice %6 {offsets = [0, 128], sizes = [16, 32], strides = [1, 1]} : vector<16x384xf32> to vector<16x32xf32>
    %18 = vector.extract_strided_slice %6 {offsets = [0, 160], sizes = [16, 32], strides = [1, 1]} : vector<16x384xf32> to vector<16x32xf32>
    %19 = vector.extract_strided_slice %6 {offsets = [0, 192], sizes = [16, 32], strides = [1, 1]} : vector<16x384xf32> to vector<16x32xf32>
    %20 = vector.extract_strided_slice %6 {offsets = [0, 224], sizes = [16, 32], strides = [1, 1]} : vector<16x384xf32> to vector<16x32xf32>
    %21 = vector.shape_cast %17 : vector<16x32xf32> to vector<1x16x32xf32>
    %22 = vector.shape_cast %18 : vector<16x32xf32> to vector<1x16x32xf32>
    %23 = vector.shape_cast %19 : vector<16x32xf32> to vector<1x16x32xf32>
    %24 = vector.shape_cast %20 : vector<16x32xf32> to vector<1x16x32xf32>
    %25 = tpu.concatenate %21, %22, %23, %24 in 0 : vector<1x16x32xf32>, vector<1x16x32xf32>, vector<1x16x32xf32>, vector<1x16x32xf32> -> vector<4x16x32xf32>
    %26 = vector.shape_cast %25 : vector<4x16x32xf32> to vector<8x8x32xf32>
    %27 = vector.extract_strided_slice %6 {offsets = [0, 256], sizes = [16, 32], strides = [1, 1]} : vector<16x384xf32> to vector<16x32xf32>
    %28 = vector.extract_strided_slice %6 {offsets = [0, 288], sizes = [16, 32], strides = [1, 1]} : vector<16x384xf32> to vector<16x32xf32>
    %29 = vector.extract_strided_slice %6 {offsets = [0, 320], sizes = [16, 32], strides = [1, 1]} : vector<16x384xf32> to vector<16x32xf32>
    %30 = vector.extract_strided_slice %6 {offsets = [0, 352], sizes = [16, 32], strides = [1, 1]} : vector<16x384xf32> to vector<16x32xf32>
    %31 = vector.shape_cast %27 : vector<16x32xf32> to vector<1x16x32xf32>
    %32 = vector.shape_cast %28 : vector<16x32xf32> to vector<1x16x32xf32>
    %33 = vector.shape_cast %29 : vector<16x32xf32> to vector<1x16x32xf32>
    %34 = vector.shape_cast %30 : vector<16x32xf32> to vector<1x16x32xf32>
    %35 = tpu.concatenate %31, %32, %33, %34 in 0 : vector<1x16x32xf32>, vector<1x16x32xf32>, vector<1x16x32xf32>, vector<1x16x32xf32> -> vector<4x16x32xf32>
    %36 = vector.shape_cast %35 : vector<4x16x32xf32> to vector<8x8x32xf32>
    "tpu.trace_start"() <{level = 10 : i32, message = "gnd,gmd->gnm"}> : () -> ()
    %cst_6 = arith.constant dense<0.000000e+00> : vector<8x8x8xf32>
    %37 = tpu.matmul %16, %26, %cst_6 {dimension_numbers = #tpu.dot_dimension_numbers<[2], [2], [1], [1], [0, 0, 0, 1, 1, 1], [0], [0]>} : vector<8x8x32xf32>, vector<8x8x32xf32>, vector<8x8x8xf32> -> vector<8x8x8xf32>
    "tpu.trace_stop"() : () -> ()
    %cst_7 = arith.constant dense<0xFF800000> : vector<8x8xf32>
    %38 = vector.multi_reduction <maximumf>, %37, %cst_7 [2] : vector<8x8x8xf32> to vector<8x8xf32>
    %39 = vector.shape_cast %38 : vector<8x8xf32> to vector<8x8x1xf32>
    %40 = vector.broadcast %39 : vector<8x8x1xf32> to vector<8x8x8xf32>
    %41 = arith.subf %37, %40 : vector<8x8x8xf32>
    %42 = math.exp %41 : vector<8x8x8xf32>
    %cst_8 = arith.constant dense<0.000000e+00> : vector<8x8xf32>
    %43 = vector.multi_reduction <add>, %42, %cst_8 [2] : vector<8x8x8xf32> to vector<8x8xf32>
    %44 = vector.shape_cast %43 : vector<8x8xf32> to vector<8x8x1xf32>
    %45 = tpu.reciprocal %44 {approx = true} : vector<8x8x1xf32> -> vector<8x8x1xf32>
    %46 = vector.broadcast %45 : vector<8x8x1xf32> to vector<8x8x8xf32>
    %47 = arith.mulf %42, %46 : vector<8x8x8xf32>
    "tpu.trace_start"() <{level = 10 : i32, message = "gnm,gmd->gnd"}> : () -> ()
    %cst_9 = arith.constant dense<0.000000e+00> : vector<8x8x32xf32>
    %48 = tpu.matmul %47, %36, %cst_9 {dimension_numbers = #tpu.dot_dimension_numbers<[2], [1], [1], [2], [0, 0, 0, 1, 1, 2], [0], [0]>} : vector<8x8x8xf32>, vector<8x8x32xf32>, vector<8x8x32xf32> -> vector<8x8x32xf32>
    "tpu.trace_stop"() : () -> ()
    %49 = vector.shape_cast %48 : vector<8x8x32xf32> to vector<4x16x32xf32>
    %c0_10 = arith.constant 0 : index
    %c0_11 = arith.constant 0 : index
    %c0_12 = arith.constant 0 : index
    %50 = vector.load %arg4[%c0_10, %c0_11, %c0_12] : memref<4x32x128xf32, #tpu.memory_space<vmem>>, vector<4x32x128xf32>
    "tpu.trace_start"() <{level = 10 : i32, message = "hrd,hde->hre"}> : () -> ()
    %cst_13 = arith.constant dense<0.000000e+00> : vector<4x16x128xf32>
    %51 = tpu.matmul %49, %50, %cst_13 {dimension_numbers = #tpu.dot_dimension_numbers<[2], [1], [1], [2], [0, 0, 0, 1, 1, 2], [0], [0]>} : vector<4x16x32xf32>, vector<4x32x128xf32>, vector<4x16x128xf32> -> vector<4x16x128xf32>
    "tpu.trace_stop"() : () -> ()
    %cst_14 = arith.constant dense<0.000000e+00> : vector<16x128xf32>
    %52 = vector.multi_reduction <add>, %51, %cst_14 [0] : vector<4x16x128xf32> to vector<16x128xf32>
    %c0_15 = arith.constant 0 : index
    %c0_16 = arith.constant 0 : index
    %53 = vector.load %arg5[%c0_15, %c0_16] : memref<1x128xf32, #tpu.memory_space<vmem>>, vector<1x128xf32>
    %54 = vector.broadcast %53 : vector<1x128xf32> to vector<16x128xf32>
    %55 = arith.addf %52, %54 : vector<16x128xf32>
    %56 = arith.addf %1, %55 : vector<16x128xf32>
    %c0_17 = arith.constant 0 : index
    %c0_18 = arith.constant 0 : index
    %57 = vector.load %arg6[%c0_17, %c0_18] : memref<1x128xf32, #tpu.memory_space<vmem>>, vector<1x128xf32>
    %c0_19 = arith.constant 0 : index
    %c0_20 = arith.constant 0 : index
    %58 = vector.load %arg7[%c0_19, %c0_20] : memref<1x128xf32, #tpu.memory_space<vmem>>, vector<1x128xf32>
    %cst_21 = arith.constant dense<0.000000e+00> : vector<16xf32>
    %59 = vector.multi_reduction <add>, %56, %cst_21 [1] : vector<16x128xf32> to vector<16xf32>
    %60 = vector.shape_cast %59 : vector<16xf32> to vector<16x1xf32>
    %cst_22 = arith.constant 1.280000e+02 : f32
    %61 = vector.broadcast %cst_22 : f32 to vector<16x1xf32>
    %62 = arith.divf %60, %61 : vector<16x1xf32>
    %63 = vector.broadcast %62 : vector<16x1xf32> to vector<16x128xf32>
    %64 = arith.subf %56, %63 : vector<16x128xf32>
    %65 = arith.mulf %64, %64 : vector<16x128xf32>
    %cst_23 = arith.constant dense<0.000000e+00> : vector<16xf32>
    %66 = vector.multi_reduction <add>, %65, %cst_23 [1] : vector<16x128xf32> to vector<16xf32>
    %67 = vector.shape_cast %66 : vector<16xf32> to vector<16x1xf32>
    %cst_24 = arith.constant 1.280000e+02 : f32
    %68 = vector.broadcast %cst_24 : f32 to vector<16x1xf32>
    %69 = arith.divf %67, %68 : vector<16x1xf32>
    %70 = vector.broadcast %62 : vector<16x1xf32> to vector<16x128xf32>
    %71 = arith.subf %56, %70 : vector<16x128xf32>
    %cst_25 = arith.constant 9.99999974E-6 : f32
    %72 = vector.broadcast %cst_25 : f32 to vector<16x1xf32>
    %73 = arith.addf %69, %72 : vector<16x1xf32>
    %74 = math.rsqrt %73 : vector<16x1xf32>
    %75 = vector.broadcast %74 : vector<16x1xf32> to vector<16x128xf32>
    %76 = arith.mulf %71, %75 : vector<16x128xf32>
    %77 = vector.broadcast %57 : vector<1x128xf32> to vector<16x128xf32>
    %78 = arith.mulf %76, %77 : vector<16x128xf32>
    %79 = vector.broadcast %58 : vector<1x128xf32> to vector<16x128xf32>
    %80 = arith.addf %78, %79 : vector<16x128xf32>
    %c0_26 = arith.constant 0 : index
    %c0_27 = arith.constant 0 : index
    %81 = vector.load %arg8[%c0_26, %c0_27] : memref<128x256xf32, #tpu.memory_space<vmem>>, vector<128x256xf32>
    %cst_28 = arith.constant dense<0.000000e+00> : vector<16x256xf32>
    %82 = tpu.matmul %80, %81, %cst_28 {dimension_numbers = #tpu.dot_dimension_numbers<[1], [0], [0], [1], [0, 0, 1, 1], [], []>} : vector<16x128xf32>, vector<128x256xf32>, vector<16x256xf32> -> vector<16x256xf32>
    %c0_29 = arith.constant 0 : index
    %c0_30 = arith.constant 0 : index
    %83 = vector.load %arg9[%c0_29, %c0_30] : memref<1x256xf32, #tpu.memory_space<vmem>>, vector<1x256xf32>
    %84 = vector.broadcast %83 : vector<1x256xf32> to vector<16x256xf32>
    %85 = arith.addf %82, %84 : vector<16x256xf32>
    %cst_31 = arith.constant 5.000000e-01 : f32
    %86 = vector.broadcast %cst_31 : f32 to vector<16x256xf32>
    %87 = arith.mulf %86, %85 : vector<16x256xf32>
    %cst_32 = arith.constant 0.707106769 : f32
    %88 = vector.broadcast %cst_32 : f32 to vector<16x256xf32>
    %89 = arith.mulf %85, %88 : vector<16x256xf32>
    %90 = math.erf %89 : vector<16x256xf32>
    %cst_33 = arith.constant 1.000000e+00 : f32
    %91 = vector.broadcast %cst_33 : f32 to vector<16x256xf32>
    %92 = arith.addf %91, %90 : vector<16x256xf32>
    %93 = arith.mulf %87, %92 : vector<16x256xf32>
    %c0_34 = arith.constant 0 : index
    %c0_35 = arith.constant 0 : index
    %94 = vector.load %arg10[%c0_34, %c0_35] : memref<256x128xf32, #tpu.memory_space<vmem>>, vector<256x128xf32>
    %cst_36 = arith.constant dense<0.000000e+00> : vector<16x128xf32>
    %95 = tpu.matmul %93, %94, %cst_36 {dimension_numbers = #tpu.dot_dimension_numbers<[1], [0], [0], [1], [0, 0, 1, 1], [], []>} : vector<16x256xf32>, vector<256x128xf32>, vector<16x128xf32> -> vector<16x128xf32>
    %c0_37 = arith.constant 0 : index
    %c0_38 = arith.constant 0 : index
    %96 = vector.load %arg11[%c0_37, %c0_38] : memref<1x128xf32, #tpu.memory_space<vmem>>, vector<1x128xf32>
    %97 = vector.broadcast %96 : vector<1x128xf32> to vector<16x128xf32>
    %98 = arith.addf %95, %97 : vector<16x128xf32>
    %99 = arith.addf %80, %98 : vector<16x128xf32>
    %c0_39 = arith.constant 0 : index
    %c0_40 = arith.constant 0 : index
    %100 = vector.load %arg12[%c0_39, %c0_40] : memref<1x128xf32, #tpu.memory_space<vmem>>, vector<1x128xf32>
    %c0_41 = arith.constant 0 : index
    %c0_42 = arith.constant 0 : index
    %101 = vector.load %arg13[%c0_41, %c0_42] : memref<1x128xf32, #tpu.memory_space<vmem>>, vector<1x128xf32>
    %cst_43 = arith.constant dense<0.000000e+00> : vector<16xf32>
    %102 = vector.multi_reduction <add>, %99, %cst_43 [1] : vector<16x128xf32> to vector<16xf32>
    %103 = vector.shape_cast %102 : vector<16xf32> to vector<16x1xf32>
    %cst_44 = arith.constant 1.280000e+02 : f32
    %104 = vector.broadcast %cst_44 : f32 to vector<16x1xf32>
    %105 = arith.divf %103, %104 : vector<16x1xf32>
    %106 = vector.broadcast %105 : vector<16x1xf32> to vector<16x128xf32>
    %107 = arith.subf %99, %106 : vector<16x128xf32>
    %108 = arith.mulf %107, %107 : vector<16x128xf32>
    %cst_45 = arith.constant dense<0.000000e+00> : vector<16xf32>
    %109 = vector.multi_reduction <add>, %108, %cst_45 [1] : vector<16x128xf32> to vector<16xf32>
    %110 = vector.shape_cast %109 : vector<16xf32> to vector<16x1xf32>
    %cst_46 = arith.constant 1.280000e+02 : f32
    %111 = vector.broadcast %cst_46 : f32 to vector<16x1xf32>
    %112 = arith.divf %110, %111 : vector<16x1xf32>
    %113 = vector.broadcast %105 : vector<16x1xf32> to vector<16x128xf32>
    %114 = arith.subf %99, %113 : vector<16x128xf32>
    %cst_47 = arith.constant 9.99999974E-6 : f32
    %115 = vector.broadcast %cst_47 : f32 to vector<16x1xf32>
    %116 = arith.addf %112, %115 : vector<16x1xf32>
    %117 = math.rsqrt %116 : vector<16x1xf32>
    %118 = vector.broadcast %117 : vector<16x1xf32> to vector<16x128xf32>
    %119 = arith.mulf %114, %118 : vector<16x128xf32>
    %120 = vector.broadcast %100 : vector<1x128xf32> to vector<16x128xf32>
    %121 = arith.mulf %119, %120 : vector<16x128xf32>
    %122 = vector.broadcast %101 : vector<1x128xf32> to vector<16x128xf32>
    %123 = arith.addf %121, %122 : vector<16x128xf32>
    %124 = vector.shape_cast %123 : vector<16x128xf32> to vector<2x8x128xf32>
    %c0_48 = arith.constant 0 : index
    %c0_49 = arith.constant 0 : index
    %c0_50 = arith.constant 0 : index
    %125 = vector.load %arg14[%c0_48, %c0_49, %c0_50] : memref<2x8x128xf32, #tpu.memory_space<vmem>>, vector<2x8x128xf32>
    tpu.vector_store %arg14[%c0_48, %c0_49, %c0_50], %124 {strides = array<i32>} : memref<2x8x128xf32, #tpu.memory_space<vmem>>, vector<2x8x128xf32>,
    return
  }
  func.func @transform_0(%arg0: i32) -> (i32, i32, i32) {
    %c0_i32 = arith.constant 0 : i32
    %c0_i32_0 = arith.constant 0 : i32
    %c0_i32_1 = arith.constant 0 : i32
    return %arg0, %c0_i32, %c0_i32_0 : i32, i32, i32
  }
  func.func @transform_1(%arg0: i32) -> (i32, i32) {
    %c0_i32 = arith.constant 0 : i32
    %c0_i32_0 = arith.constant 0 : i32
    %c0_i32_1 = arith.constant 0 : i32
    return %c0_i32, %c0_i32_0 : i32, i32
  }
  func.func @transform_2(%arg0: i32) -> (i32, i32) {
    %c0_i32 = arith.constant 0 : i32
    %c0_i32_0 = arith.constant 0 : i32
    %c0_i32_1 = arith.constant 0 : i32
    return %c0_i32, %c0_i32_0 : i32, i32
  }
  func.func @transform_3(%arg0: i32) -> (i32, i32, i32) {
    %c0_i32 = arith.constant 0 : i32
    %c0_i32_0 = arith.constant 0 : i32
    %c0_i32_1 = arith.constant 0 : i32
    %c0_i32_2 = arith.constant 0 : i32
    return %c0_i32, %c0_i32_0, %c0_i32_1 : i32, i32, i32
  }
  func.func @transform_4(%arg0: i32) -> (i32, i32) {
    %c0_i32 = arith.constant 0 : i32
    %c0_i32_0 = arith.constant 0 : i32
    %c0_i32_1 = arith.constant 0 : i32
    return %c0_i32, %c0_i32_0 : i32, i32
  }
  func.func @transform_5(%arg0: i32) -> (i32, i32) {
    %c0_i32 = arith.constant 0 : i32
    %c0_i32_0 = arith.constant 0 : i32
    %c0_i32_1 = arith.constant 0 : i32
    return %c0_i32, %c0_i32_0 : i32, i32
  }
  func.func @transform_6(%arg0: i32) -> (i32, i32) {
    %c0_i32 = arith.constant 0 : i32
    %c0_i32_0 = arith.constant 0 : i32
    %c0_i32_1 = arith.constant 0 : i32
    return %c0_i32, %c0_i32_0 : i32, i32
  }
  func.func @transform_7(%arg0: i32) -> (i32, i32) {
    %c0_i32 = arith.constant 0 : i32
    %c0_i32_0 = arith.constant 0 : i32
    %c0_i32_1 = arith.constant 0 : i32
    return %c0_i32, %c0_i32_0 : i32, i32
  }
  func.func @transform_8(%arg0: i32) -> (i32, i32) {
    %c0_i32 = arith.constant 0 : i32
    %c0_i32_0 = arith.constant 0 : i32
    %c0_i32_1 = arith.constant 0 : i32
    return %c0_i32, %c0_i32_0 : i32, i32
  }
  func.func @transform_9(%arg0: i32) -> (i32, i32) {
    %c0_i32 = arith.constant 0 : i32
    %c0_i32_0 = arith.constant 0 : i32
    %c0_i32_1 = arith.constant 0 : i32
    return %c0_i32, %c0_i32_0 : i32, i32
  }
  func.func @transform_10(%arg0: i32) -> (i32, i32) {
    %c0_i32 = arith.constant 0 : i32
    %c0_i32_0 = arith.constant 0 : i32
    %c0_i32_1 = arith.constant 0 : i32
    return %c0_i32, %c0_i32_0 : i32, i32
  }
  func.func @transform_11(%arg0: i32) -> (i32, i32) {
    %c0_i32 = arith.constant 0 : i32
    %c0_i32_0 = arith.constant 0 : i32
    %c0_i32_1 = arith.constant 0 : i32
    return %c0_i32, %c0_i32_0 : i32, i32
  }
  func.func @transform_12(%arg0: i32) -> (i32, i32) {
    %c0_i32 = arith.constant 0 : i32
    %c0_i32_0 = arith.constant 0 : i32
    %c0_i32_1 = arith.constant 0 : i32
    return %c0_i32, %c0_i32_0 : i32, i32
  }
  func.func @transform_13(%arg0: i32) -> (i32, i32, i32) {
    %c0_i32 = arith.constant 0 : i32
    %c0_i32_0 = arith.constant 0 : i32
    %c0_i32_1 = arith.constant 0 : i32
    return %arg0, %c0_i32, %c0_i32_0 : i32, i32, i32
  }
}

</mosaic_0001>

<llo_original>
// kernel: tpu_custom_call.1
$region0: #{tpu_custom_call.1}
  #allocation0 [shape = 'u32[]', space=smem, size = 0x4, offset = 0x4, fixed_abs, tag = 'smem constant byte address 0x4 - core index']
  #allocation1 [shape = 'u32[72,128]{1,0:T(1,128)}', space=vmem, size = 0x9000, scoped, tag = 'internal scratch']
  %s0 = inlined_call_operand.hbm [shape: f32[4,8,128], index: 0, kind: input, shape index: {}]
  %s1 = inlined_call_operand.hbm [shape: f32[128,384], index: 1, kind: input, shape index: {}]
  %s2 = inlined_call_operand.hbm [shape: f32[1,384], index: 2, kind: input, shape index: {}]
  %s3 = inlined_call_operand.hbm [shape: f32[4,32,128], index: 3, kind: input, shape index: {}]
  %s4 = inlined_call_operand.vmem [shape: f32[1,128], index: 4, kind: input, shape index: {}]
  %s5 = inlined_call_operand.vmem [shape: f32[1,128], index: 5, kind: input, shape index: {}]
  %s6 = inlined_call_operand.vmem [shape: f32[1,128], index: 6, kind: input, shape index: {}]
  %s7 = inlined_call_operand.hbm [shape: f32[128,256], index: 7, kind: input, shape index: {}]
  %s8 = inlined_call_operand.vmem [shape: f32[1,256], index: 8, kind: input, shape index: {}]
  %s9 = inlined_call_operand.hbm [shape: f32[256,128], index: 9, kind: input, shape index: {}]
  %s10 = inlined_call_operand.vmem [shape: f32[1,128], index: 10, kind: input, shape index: {}]
  %s11 = inlined_call_operand.vmem [shape: f32[1,128], index: 11, kind: input, shape index: {}]
  %s12 = inlined_call_operand.vmem [shape: f32[1,128], index: 12, kind: input, shape index: {}]
  %s13 = inlined_call_operand.hbm [shape: f32[4,8,128], index: 13, kind: output, shape index: {}]
  %s14 = sld [smem:[#allocation0]]
  $region109: #{tpu_custom_call.1} parent=0
    _
  %s16 = ssub.s32 1, %s14
  %s17 = scalar_select 0, %s16, %s14
  $region1: #{tpu_custom_call.1} parent=0
    #allocation2 [shape = 'u8[16384]{0}', space=vmem, size = 0x4000, scoped, tag = 'input window, operand 0']
    #allocation3 [shape = 's32[2]{0}', space=sflag, size = 0x8, scoped, tag = 'scoped memory for tpu_custom_call.1']
    #allocation4 [shape = 's32[2]{0}', space=sflag, size = 0x8, scoped, tag = 'scoped memory for tpu_custom_call.1']
    #allocation5 [shape = 'u8[196608]{0}', space=vmem, size = 0x30000, scoped, tag = 'input window, operand 1, single buffered']
    #allocation6 [shape = 's32[1]{0}', space=sflag, size = 0x4, scoped, tag = 'scoped memory for tpu_custom_call.1']
    #allocation7 [shape = 'u8[1536]{0}', space=vmem, size = 0x800, scoped, tag = 'input window, operand 2, single buffered']
    #allocation8 [shape = 'u8[65536]{0}', space=vmem, size = 0x10000, scoped, tag = 'input window, operand 3, single buffered']
    #allocation9 [shape = 's32[1]{0}', space=sflag, size = 0x4, scoped, tag = 'scoped memory for tpu_custom_call.1']
    #allocation10 [shape = 'u8[131072]{0}', space=vmem, size = 0x20000, scoped, tag = 'input window, operand 7, single buffered']
    #allocation11 [shape = 'u8[131072]{0}', space=vmem, size = 0x20000, scoped, tag = 'input window, operand 9, single buffered']
    #allocation12 [shape = 's32[1]{0}', space=sflag, size = 0x4, scoped, tag = 'scoped memory for tpu_custom_call.1']
    #allocation13 [shape = 'u8[16384]{0}', space=vmem, size = 0x4000, scoped, tag = 'output window, operand 0']
    %18 = vsyncpa [#allocation3], 0
    %s19 = scalar_lea.sflag [#allocation3], 1
    %20 = vsyncpa %s19, 0
    %21 = vsyncpa [#allocation6], 0
    %22 = vsyncpa [#allocation9], 0
    %23 = vsyncpa [#allocation12], 0
    %24 = vsyncpa [#allocation4], 0
    %s25 = scalar_lea.sflag [#allocation4], 1
    %26 = vsyncpa %s25, 0
    loop: start=0, step=1, limit=4
    $region2: #{tpu_custom_call.1} parent=1 // loop_pre_header
      _
    $region3: #{tpu_custom_call.1} parent=1 // loop_header
      %s28 = sphi 0, %s32
      %p29 = scmp.ge.s32.totalorder %s28, 4
      %s38 = sphi 0, %s40
      %s41 = sphi 0, %s38
      %s42 = sphi 0, %s41
      %s58 = sphi 0, %s42
      %s62 = sphi 0, %s62
      %s64 = sphi 0, %s62
      %s65 = sphi 0, %s64
      %s79 = sphi 0, %s65
      %s83 = sphi 0, %s83
      %s85 = sphi 0, %s83
      %s86 = sphi 0, %s85
      %s100 = sphi 0, %s86
      %s104 = sphi 0, %s104
      %s106 = sphi 0, %s104
      %s107 = sphi 0, %s106
      %s121 = sphi 0, %s107
      %s125 = sphi 0, %s125
      %s127 = sphi 0, %s125
      %s128 = sphi 0, %s127
      %s142 = sphi 0, %s128
      %s146 = sphi 0, %s146
      %s148 = sphi 0, %s146
      %s149 = sphi 0, %s148
      %s163 = sphi 0, %s149
      %s167 = sphi 0, %s167
      %s169 = sphi 0, %s167
      %s170 = sphi 0, %s169
      %s184 = sphi 0, %s170
      %s188 = sphi 0, %s188
      %s190 = sphi 0, %s188
      %s191 = sphi 0, %s190
      %s205 = sphi 0, %s191
      %s209 = sphi 0, %s209
      %s211 = sphi 0, %s209
      %s212 = sphi 0, %s211
      %s226 = sphi 0, %s212
      %s230 = sphi 0, %s230
      %s232 = sphi 0, %s230
      %s233 = sphi 0, %s232
      %s247 = sphi 0, %s233
      %s251 = sphi 0, %s251
      %s253 = sphi 0, %s251
      %s254 = sphi 0, %s253
      %s268 = sphi 0, %s254
      %s272 = sphi 0, %s272
      %s274 = sphi 0, %s272
      %s275 = sphi 0, %s274
      %s289 = sphi 0, %s275
      %s293 = sphi 0, %s293
      %s295 = sphi 0, %s293
      %s296 = sphi 0, %s295
      %s310 = sphi 0, %s296
      %s316 = sphi 0, %s318
      %s319 = sphi 0, %s316
      %s320 = sphi 0, %s319
      %s336 = sphi 0, %s320
    $region4: #{tpu_custom_call.1} parent=1 // loop_header_branch
      %31 = sbr.rel (%p29) target = $region8
    $region5: #{tpu_custom_call.1} parent=1 // loop_body
      %s33 = ssub.s32 %s28, 1
      %s34 = ssub.s32 %s28, 2
      %s35 = sadd.s32 %s28, 1
      %s36 = ssub.s32 %s28, %s35
      %p37 = scmp.eq.s32.totalorder %s36, 0
      %s39 = sadd.s32 %s38, 1
      %s40 = scalar_select %p37, %s38, %s39
      %p43 = pneg %p37
      %p44 = scmp.eq.s32.totalorder %s28, 1
      %p45 = por %p43, %p44
      %p46 = scmp.ne.s32.totalorder %s38, %s41
      %p47 = scmp.eq.s32.totalorder %s28, 0
      %p48 = por %p46, %p47
      %p49 = scmp.ne.s32.totalorder %s38, %s41
      %p50 = scmp.eq.s32.totalorder %s33, 1
      %p51 = por %p49, %p50
      %p52 = scmp.ne.s32.totalorder %s41, %s42
      %p53 = scmp.eq.s32.totalorder %s33, 0
      %p54 = por %p52, %p53
      %p55 = scmp.ne.s32.totalorder %s41, %s42
      %p56 = scmp.eq.s32.totalorder %s34, 1
      %p57 = por %p55, %p56
      %p59 = scmp.ne.s32.totalorder %s42, %s58
      %p60 = scmp.eq.s32.totalorder %s34, 0
      %p61 = por %p59, %p60
      %s63 = sadd.s32 %s62, 1
      %p66 = scmp.eq.s32.totalorder %s28, 1
      %p67 = scmp.ne.s32.totalorder %s62, %s64
      %p68 = scmp.eq.s32.totalorder %s28, 0
      %p69 = por %p67, %p68
      %p70 = scmp.ne.s32.totalorder %s62, %s64
      %p71 = scmp.eq.s32.totalorder %s33, 1
      %p72 = por %p70, %p71
      %p73 = scmp.ne.s32.totalorder %s64, %s65
      %p74 = scmp.eq.s32.totalorder %s33, 0
      %p75 = por %p73, %p74
      %p76 = scmp.ne.s32.totalorder %s64, %s65
      %p77 = scmp.eq.s32.totalorder %s34, 1
      %p78 = por %p76, %p77
      %p80 = scmp.ne.s32.totalorder %s65, %s79
      %p81 = scmp.eq.s32.totalorder %s34, 0
      %p82 = por %p80, %p81
      %s84 = sadd.s32 %s83, 1
      %p87 = scmp.eq.s32.totalorder %s28, 1
      %p88 = scmp.ne.s32.totalorder %s83, %s85
      %p89 = scmp.eq.s32.totalorder %s28, 0
      %p90 = por %p88, %p89
      %p91 = scmp.ne.s32.totalorder %s83, %s85
      %p92 = scmp.eq.s32.totalorder %s33, 1
      %p93 = por %p91, %p92
      %p94 = scmp.ne.s32.totalorder %s85, %s86
      %p95 = scmp.eq.s32.totalorder %s33, 0
      %p96 = por %p94, %p95
      %p97 = scmp.ne.s32.totalorder %s85, %s86
      %p98 = scmp.eq.s32.totalorder %s34, 1
      %p99 = por %p97, %p98
      %p101 = scmp.ne.s32.totalorder %s86, %s100
      %p102 = scmp.eq.s32.totalorder %s34, 0
      %p103 = por %p101, %p102
      %s105 = sadd.s32 %s104, 1
      %p108 = scmp.eq.s32.totalorder %s28, 1
      %p109 = scmp.ne.s32.totalorder %s104, %s106
      %p110 = scmp.eq.s32.totalorder %s28, 0
      %p111 = por %p109, %p110
      %p112 = scmp.ne.s32.totalorder %s104, %s106
      %p113 = scmp.eq.s32.totalorder %s33, 1
      %p114 = por %p112, %p113
      %p115 = scmp.ne.s32.totalorder %s106, %s107
      %p116 = scmp.eq.s32.totalorder %s33, 0
      %p117 = por %p115, %p116
      %p118 = scmp.ne.s32.totalorder %s106, %s107
      %p119 = scmp.eq.s32.totalorder %s34, 1
      %p120 = por %p118, %p119
      %p122 = scmp.ne.s32.totalorder %s107, %s121
      %p123 = scmp.eq.s32.totalorder %s34, 0
      %p124 = por %p122, %p123
      %s126 = sadd.s32 %s125, 1
      %p129 = scmp.eq.s32.totalorder %s28, 1
      %p130 = scmp.ne.s32.totalorder %s125, %s127
      %p131 = scmp.eq.s32.totalorder %s28, 0
      %p132 = por %p130, %p131
      %p133 = scmp.ne.s32.totalorder %s125, %s127
      %p134 = scmp.eq.s32.totalorder %s33, 1
      %p135 = por %p133, %p134
      %p136 = scmp.ne.s32.totalorder %s127, %s128
      %p137 = scmp.eq.s32.totalorder %s33, 0
      %p138 = por %p136, %p137
      %p139 = scmp.ne.s32.totalorder %s127, %s128
      %p140 = scmp.eq.s32.totalorder %s34, 1
      %p141 = por %p139, %p140
      %p143 = scmp.ne.s32.totalorder %s128, %s142
      %p144 = scmp.eq.s32.totalorder %s34, 0
      %p145 = por %p143, %p144
      %s147 = sadd.s32 %s146, 1
      %p150 = scmp.eq.s32.totalorder %s28, 1
      %p151 = scmp.ne.s32.totalorder %s146, %s148
      %p152 = scmp.eq.s32.totalorder %s28, 0
      %p153 = por %p151, %p152
      %p154 = scmp.ne.s32.totalorder %s146, %s148
      %p155 = scmp.eq.s32.totalorder %s33, 1
      %p156 = por %p154, %p155
      %p157 = scmp.ne.s32.totalorder %s148, %s149
      %p158 = scmp.eq.s32.totalorder %s33, 0
      %p159 = por %p157, %p158
      %p160 = scmp.ne.s32.totalorder %s148, %s149
      %p161 = scmp.eq.s32.totalorder %s34, 1
      %p162 = por %p160, %p161
      %p164 = scmp.ne.s32.totalorder %s149, %s163
      %p165 = scmp.eq.s32.totalorder %s34, 0
      %p166 = por %p164, %p165
      %s168 = sadd.s32 %s167, 1
      %p171 = scmp.eq.s32.totalorder %s28, 1
      %p172 = scmp.ne.s32.totalorder %s167, %s169
      %p173 = scmp.eq.s32.totalorder %s28, 0
      %p174 = por %p172, %p173
      %p175 = scmp.ne.s32.totalorder %s167, %s169
      %p176 = scmp.eq.s32.totalorder %s33, 1
      %p177 = por %p175, %p176
      %p178 = scmp.ne.s32.totalorder %s169, %s170
      %p179 = scmp.eq.s32.totalorder %s33, 0
      %p180 = por %p178, %p179
      %p181 = scmp.ne.s32.totalorder %s169, %s170
      %p182 = scmp.eq.s32.totalorder %s34, 1
      %p183 = por %p181, %p182
      %p185 = scmp.ne.s32.totalorder %s170, %s184
      %p186 = scmp.eq.s32.totalorder %s34, 0
      %p187 = por %p185, %p186
      %s189 = sadd.s32 %s188, 1
      %p192 = scmp.eq.s32.totalorder %s28, 1
      %p193 = scmp.ne.s32.totalorder %s188, %s190
      %p194 = scmp.eq.s32.totalorder %s28, 0
      %p195 = por %p193, %p194
      %p196 = scmp.ne.s32.totalorder %s188, %s190
      %p197 = scmp.eq.s32.totalorder %s33, 1
      %p198 = por %p196, %p197
      %p199 = scmp.ne.s32.totalorder %s190, %s191
      %p200 = scmp.eq.s32.totalorder %s33, 0
      %p201 = por %p199, %p200
      %p202 = scmp.ne.s32.totalorder %s190, %s191
      %p203 = scmp.eq.s32.totalorder %s34, 1
      %p204 = por %p202, %p203
      %p206 = scmp.ne.s32.totalorder %s191, %s205
      %p207 = scmp.eq.s32.totalorder %s34, 0
      %p208 = por %p206, %p207
      %s210 = sadd.s32 %s209, 1
      %p213 = scmp.eq.s32.totalorder %s28, 1
      %p214 = scmp.ne.s32.totalorder %s209, %s211
      %p215 = scmp.eq.s32.totalorder %s28, 0
      %p216 = por %p214, %p215
      %p217 = scmp.ne.s32.totalorder %s209, %s211
      %p218 = scmp.eq.s32.totalorder %s33, 1
      %p219 = por %p217, %p218
      %p220 = scmp.ne.s32.totalorder %s211, %s212
      %p221 = scmp.eq.s32.totalorder %s33, 0
      %p222 = por %p220, %p221
      %p223 = scmp.ne.s32.totalorder %s211, %s212
      %p224 = scmp.eq.s32.totalorder %s34, 1
      %p225 = por %p223, %p224
      %p227 = scmp.ne.s32.totalorder %s212, %s226
      %p228 = scmp.eq.s32.totalorder %s34, 0
      %p229 = por %p227, %p228
      %s231 = sadd.s32 %s230, 1
      %p234 = scmp.eq.s32.totalorder %s28, 1
      %p235 = scmp.ne.s32.totalorder %s230, %s232
      %p236 = scmp.eq.s32.totalorder %s28, 0
      %p237 = por %p235, %p236
      %p238 = scmp.ne.s32.totalorder %s230, %s232
      %p239 = scmp.eq.s32.totalorder %s33, 1
      %p240 = por %p238, %p239
      %p241 = scmp.ne.s32.totalorder %s232, %s233
      %p242 = scmp.eq.s32.totalorder %s33, 0
      %p243 = por %p241, %p242
      %p244 = scmp.ne.s32.totalorder %s232, %s233
      %p245 = scmp.eq.s32.totalorder %s34, 1
      %p246 = por %p244, %p245
      %p248 = scmp.ne.s32.totalorder %s233, %s247
      %p249 = scmp.eq.s32.totalorder %s34, 0
      %p250 = por %p248, %p249
      %s252 = sadd.s32 %s251, 1
      %p255 = scmp.eq.s32.totalorder %s28, 1
      %p256 = scmp.ne.s32.totalorder %s251, %s253
      %p257 = scmp.eq.s32.totalorder %s28, 0
      %p258 = por %p256, %p257
      %p259 = scmp.ne.s32.totalorder %s251, %s253
      %p260 = scmp.eq.s32.totalorder %s33, 1
      %p261 = por %p259, %p260
      %p262 = scmp.ne.s32.totalorder %s253, %s254
      %p263 = scmp.eq.s32.totalorder %s33, 0
      %p264 = por %p262, %p263
      %p265 = scmp.ne.s32.totalorder %s253, %s254
      %p266 = scmp.eq.s32.totalorder %s34, 1
      %p267 = por %p265, %p266
      %p269 = scmp.ne.s32.totalorder %s254, %s268
      %p270 = scmp.eq.s32.totalorder %s34, 0
      %p271 = por %p269, %p270
      %s273 = sadd.s32 %s272, 1
      %p276 = scmp.eq.s32.totalorder %s28, 1
      %p277 = scmp.ne.s32.totalorder %s272, %s274
      %p278 = scmp.eq.s32.totalorder %s28, 0
      %p279 = por %p277, %p278
      %p280 = scmp.ne.s32.totalorder %s272, %s274
      %p281 = scmp.eq.s32.totalorder %s33, 1
      %p282 = por %p280, %p281
      %p283 = scmp.ne.s32.totalorder %s274, %s275
      %p284 = scmp.eq.s32.totalorder %s33, 0
      %p285 = por %p283, %p284
      %p286 = scmp.ne.s32.totalorder %s274, %s275
      %p287 = scmp.eq.s32.totalorder %s34, 1
      %p288 = por %p286, %p287
      %p290 = scmp.ne.s32.totalorder %s275, %s289
      %p291 = scmp.eq.s32.totalorder %s34, 0
      %p292 = por %p290, %p291
      %s294 = sadd.s32 %s293, 1
      %p297 = scmp.eq.s32.totalorder %s28, 1
      %p298 = scmp.ne.s32.totalorder %s293, %s295
      %p299 = scmp.eq.s32.totalorder %s28, 0
      %p300 = por %p298, %p299
      %p301 = scmp.ne.s32.totalorder %s293, %s295
      %p302 = scmp.eq.s32.totalorder %s33, 1
      %p303 = por %p301, %p302
      %p304 = scmp.ne.s32.totalorder %s295, %s296
      %p305 = scmp.eq.s32.totalorder %s33, 0
      %p306 = por %p304, %p305
      %p307 = scmp.ne.s32.totalorder %s295, %s296
      %p308 = scmp.eq.s32.totalorder %s34, 1
      %p309 = por %p307, %p308
      %p311 = scmp.ne.s32.totalorder %s296, %s310
      %p312 = scmp.eq.s32.totalorder %s34, 0
      %p313 = por %p311, %p312
      %s314 = ssub.s32 %s28, %s35
      %p315 = scmp.eq.s32.totalorder %s314, 0
      %s317 = sadd.s32 %s316, 1
      %s318 = scalar_select %p315, %s316, %s317
      %p321 = pneg %p315
      %p322 = scmp.eq.s32.totalorder %s28, 1
      %p323 = por %p321, %p322
      %p324 = scmp.ne.s32.totalorder %s316, %s319
      %p325 = scmp.eq.s32.totalorder %s28, 0
      %p326 = por %p324, %p325
      %p327 = scmp.ne.s32.totalorder %s316, %s319
      %p328 = scmp.eq.s32.totalorder %s33, 1
      %p329 = por %p327, %p328
      %p330 = scmp.ne.s32.totalorder %s319, %s320
      %p331 = scmp.eq.s32.totalorder %s33, 0
      %p332 = por %p330, %p331
      %p333 = scmp.ne.s32.totalorder %s319, %s320
      %p334 = scmp.eq.s32.totalorder %s34, 1
      %p335 = por %p333, %p334
      %p337 = scmp.ne.s32.totalorder %s320, %s336
      %p338 = scmp.eq.s32.totalorder %s34, 0
      %p339 = por %p337, %p338
      %p340 = scmp.le.s32.totalorder 1, %s28
      %p341 = scmp.lt.s32.totalorder %s28, 3
      %p342 = pnand %p340, %p341
      %p343 = pneg %p342
      // Predicated region
      $region9: #{tpu_custom_call.1} parent=5 // pred_check
        _
      $region10: #{tpu_custom_call.1} parent=5 // pred_check_branch
        %345 = sbr.rel (%p342) target = $region12
      $region11: #{tpu_custom_call.1} parent=5 // pred_region
        %s346 = ssub.s32 %s28, 1
        // Predicated region
        $region13: #{tpu_custom_call.1} parent=11 // pred_check
          %p347 = pneg %p75
        $region14: #{tpu_custom_call.1} parent=11 // pred_check_branch
          %349 = sbr.rel (%p347) target = $region16
        $region15: #{tpu_custom_call.1} parent=11 // pred_region
          %351 = vsyncadd [#allocation6], 0
          %s352 = sshll.u32 %s1, 4
          %s353 = int_to_ptr.hbm [resolvable:$true] %s352
          %s354 = sshll.u32 [#allocation5], 4
          %s355 = int_to_ptr.vmem [resolvable:$true] %s354
          %360 = dma.hbm_to_vmem [thread:$0]  %s353, 6144, %s355, [#allocation6], 384, 384, 24
        $region16: #{tpu_custom_call.1} parent=11 // pred_fallthru
          _
        // Predicated region
        $region17: #{tpu_custom_call.1} parent=11 // pred_check
          %p361 = pneg %p96
        $region18: #{tpu_custom_call.1} parent=11 // pred_check_branch
          %363 = sbr.rel (%p361) target = $region20
        $region19: #{tpu_custom_call.1} parent=11 // pred_region
          %365 = vsyncadd [#allocation6], 0
          %s367 = sshll.u32 %s2, 4
          %s368 = int_to_ptr.hbm [resolvable:$true] %s367
          %s369 = sshll.u32 [#allocation7], 4
          %s370 = int_to_ptr.vmem [resolvable:$true] %s369
          %372 = dma.hbm_to_vmem [thread:$0]  %s368, 48, %s370, [#allocation6]
        $region20: #{tpu_custom_call.1} parent=11 // pred_fallthru
          _
        // Predicated region
        $region21: #{tpu_custom_call.1} parent=11 // pred_check
          %p373 = pneg %p117
        $region22: #{tpu_custom_call.1} parent=11 // pred_check_branch
          %375 = sbr.rel (%p373) target = $region24
        $region23: #{tpu_custom_call.1} parent=11 // pred_region
          %377 = vsyncadd [#allocation9], 0
          %s378 = sshll.u32 %s3, 4
          %s379 = int_to_ptr.hbm [resolvable:$true] %s378
          %s380 = sshll.u32 [#allocation8], 4
          %s381 = int_to_ptr.vmem [resolvable:$true] %s380
          %386 = dma.hbm_to_vmem [thread:$0]  %s379, 2048, %s381, [#allocation9], 128, 128, 8
        $region24: #{tpu_custom_call.1} parent=11 // pred_fallthru
          _
        // Predicated region
        $region25: #{tpu_custom_call.1} parent=11 // pred_check
          %p387 = pneg %p138
        $region26: #{tpu_custom_call.1} parent=11 // pred_check_branch
          %389 = sbr.rel (%p387) target = $region28
        $region27: #{tpu_custom_call.1} parent=11 // pred_region
          _
        $region28: #{tpu_custom_call.1} parent=11 // pred_fallthru
          _
        // Predicated region
        $region29: #{tpu_custom_call.1} parent=11 // pred_check
          %p390 = pneg %p159
        $region30: #{tpu_custom_call.1} parent=11 // pred_check_branch
          %392 = sbr.rel (%p390) target = $region32
        $region31: #{tpu_custom_call.1} parent=11 // pred_region
          _
        $region32: #{tpu_custom_call.1} parent=11 // pred_fallthru
          _
        // Predicated region
        $region33: #{tpu_custom_call.1} parent=11 // pred_check
          %p393 = pneg %p180
        $region34: #{tpu_custom_call.1} parent=11 // pred_check_branch
          %395 = sbr.rel (%p393) target = $region36
        $region35: #{tpu_custom_call.1} parent=11 // pred_region
          _
        $region36: #{tpu_custom_call.1} parent=11 // pred_fallthru
          _
        // Predicated region
        $region37: #{tpu_custom_call.1} parent=11 // pred_check
          %p396 = pneg %p201
        $region38: #{tpu_custom_call.1} parent=11 // pred_check_branch
          %398 = sbr.rel (%p396) target = $region40
        $region39: #{tpu_custom_call.1} parent=11 // pred_region
          %400 = vsyncadd [#allocation9], 0
          %s401 = sshll.u32 %s7, 4
          %s402 = int_to_ptr.hbm [resolvable:$true] %s401
          %s403 = sshll.u32 [#allocation10], 4
          %s404 = int_to_ptr.vmem [resolvable:$true] %s403
          %409 = dma.hbm_to_vmem [thread:$0]  %s402, 4096, %s404, [#allocation9], 256, 256, 16
        $region40: #{tpu_custom_call.1} parent=11 // pred_fallthru
          _
        // Predicated region
        $region41: #{tpu_custom_call.1} parent=11 // pred_check
          %p410 = pneg %p222
        $region42: #{tpu_custom_call.1} parent=11 // pred_check_branch
          %412 = sbr.rel (%p410) target = $region44
        $region43: #{tpu_custom_call.1} parent=11 // pred_region
          _
        $region44: #{tpu_custom_call.1} parent=11 // pred_fallthru
          _
        // Predicated region
        $region45: #{tpu_custom_call.1} parent=11 // pred_check
          %p413 = pneg %p243
        $region46: #{tpu_custom_call.1} parent=11 // pred_check_branch
          %415 = sbr.rel (%p413) target = $region48
        $region47: #{tpu_custom_call.1} parent=11 // pred_region
          %417 = vsyncadd [#allocation12], 0
          %s418 = sshll.u32 %s9, 4
          %s419 = int_to_ptr.hbm [resolvable:$true] %s418
          %s420 = sshll.u32 [#allocation11], 4
          %s421 = int_to_ptr.vmem [resolvable:$true] %s420
          %426 = dma.hbm_to_vmem [thread:$0]  %s419, 4096, %s421, [#allocation12], 128, 128, 8
        $region48: #{tpu_custom_call.1} parent=11 // pred_fallthru
          _
        // Predicated region
        $region49: #{tpu_custom_call.1} parent=11 // pred_check
          %p427 = pneg %p264
        $region50: #{tpu_custom_call.1} parent=11 // pred_check_branch
          %429 = sbr.rel (%p427) target = $region52
        $region51: #{tpu_custom_call.1} parent=11 // pred_region
          _
        $region52: #{tpu_custom_call.1} parent=11 // pred_fallthru
          _
        // Predicated region
        $region53: #{tpu_custom_call.1} parent=11 // pred_check
          %p430 = pneg %p285
        $region54: #{tpu_custom_call.1} parent=11 // pred_check_branch
          %432 = sbr.rel (%p430) target = $region56
        $region55: #{tpu_custom_call.1} parent=11 // pred_region
          _
        $region56: #{tpu_custom_call.1} parent=11 // pred_fallthru
          _
        // Predicated region
        $region57: #{tpu_custom_call.1} parent=11 // pred_check
          %p433 = pneg %p306
        $region58: #{tpu_custom_call.1} parent=11 // pred_check_branch
          %435 = sbr.rel (%p433) target = $region60
        $region59: #{tpu_custom_call.1} parent=11 // pred_region
          _
        $region60: #{tpu_custom_call.1} parent=11 // pred_fallthru
          _
      $region12: #{tpu_custom_call.1} parent=5 // pred_fallthru
        _
      %p436 = scmp.lt.s32.totalorder %s28, 2
      // Predicated region
      $region61: #{tpu_custom_call.1} parent=5 // pred_check
        %p437 = pneg %p436
      $region62: #{tpu_custom_call.1} parent=5 // pred_check_branch
        %439 = sbr.rel (%p437) target = $region64
      $region63: #{tpu_custom_call.1} parent=5 // pred_region
        // Predicated region
        $region65: #{tpu_custom_call.1} parent=63 // pred_check
          %p440 = pneg %p48
        $region66: #{tpu_custom_call.1} parent=63 // pred_check_branch
          %442 = sbr.rel (%p440) target = $region68
        $region67: #{tpu_custom_call.1} parent=63 // pred_region
          %s443 = sand.u32 %s38, 1
          %s444 = scalar_lea.sflag [#allocation3], %s443
          %s445 = sand.u32 %s38, 1
          %s446 = smul.addr %s445, 16
          %s447 = scalar_lea.vmem [#allocation2], %s446
          %s448 = smul.u32 2, %s28
          %450 = vsyncadd %s444, 0
          %s451 = smul.addr %s448, 8
          %s452 = scalar_lea.hbm %s0, %s451
          %s453 = sshll.u32 %s452, 4
          %s454 = int_to_ptr.hbm [resolvable:$true] %s453
          %s455 = sshll.u32 %s447, 4
          %s456 = int_to_ptr.vmem [resolvable:$true] %s455
          %461 = dma.hbm_to_vmem [thread:$0]  %s454, 256, %s456, %s444, 128, 128, 8
        $region68: #{tpu_custom_call.1} parent=63 // pred_fallthru
          _
      $region64: #{tpu_custom_call.1} parent=5 // pred_fallthru
        _
      %p462 = scmp.le.s32.totalorder 1, %s28
      %p463 = scmp.lt.s32.totalorder %s28, 3
      %p464 = pnand %p462, %p463
      %p465 = pneg %p464
      // Predicated region
      $region69: #{tpu_custom_call.1} parent=5 // pred_check
        _
      $region70: #{tpu_custom_call.1} parent=5 // pred_check_branch
        %467 = sbr.rel (%p464) target = $region72
      $region71: #{tpu_custom_call.1} parent=5 // pred_region
        %s468 = ssub.s32 %s28, 1
        %s469 = sand.u32 %s41, 1
        %s470 = scalar_lea.sflag [#allocation3], %s469
        %s471 = sand.u32 %s41, 1
        %s472 = smul.addr %s471, 16
        %s473 = scalar_lea.vmem [#allocation2], %s472
        // Predicated region
        $region73: #{tpu_custom_call.1} parent=71 // pred_check
          %p474 = pneg %p54
        $region74: #{tpu_custom_call.1} parent=71 // pred_check_branch
          %476 = sbr.rel (%p474) target = $region76
        $region75: #{tpu_custom_call.1} parent=71 // pred_region
          %478 = dma.done %s470, 256
        $region76: #{tpu_custom_call.1} parent=71 // pred_fallthru
          _
        // Predicated region
        $region77: #{tpu_custom_call.1} parent=71 // pred_check
          %p479 = pneg %p75
        $region78: #{tpu_custom_call.1} parent=71 // pred_check_branch
          %481 = sbr.rel (%p479) target = $region80
        $region79: #{tpu_custom_call.1} parent=71 // pred_region
          %483 = dma.done [#allocation6], 6144
        $region80: #{tpu_custom_call.1} parent=71 // pred_fallthru
          _
        // Predicated region
        $region81: #{tpu_custom_call.1} parent=71 // pred_check
          %p484 = pneg %p96
        $region82: #{tpu_custom_call.1} parent=71 // pred_check_branch
          %486 = sbr.rel (%p484) target = $region84
        $region83: #{tpu_custom_call.1} parent=71 // pred_region
          %488 = dma.done [#allocation6], 48
        $region84: #{tpu_custom_call.1} parent=71 // pred_fallthru
          _
        // Predicated region
        $region85: #{tpu_custom_call.1} parent=71 // pred_check
          %p489 = pneg %p117
        $region86: #{tpu_custom_call.1} parent=71 // pred_check_branch
          %491 = sbr.rel (%p489) target = $region88
        $region87: #{tpu_custom_call.1} parent=71 // pred_region
          %493 = dma.done [#allocation9], 2048
        $region88: #{tpu_custom_call.1} parent=71 // pred_fallthru
          _
        // Predicated region
        $region89: #{tpu_custom_call.1} parent=71 // pred_check
          %p494 = pneg %p201
        $region90: #{tpu_custom_call.1} parent=71 // pred_check_branch
          %496 = sbr.rel (%p494) target = $region92
        $region91: #{tpu_custom_call.1} parent=71 // pred_region
          %498 = dma.done [#allocation9], 4096
        $region92: #{tpu_custom_call.1} parent=71 // pred_fallthru
          _
        // Predicated region
        $region93: #{tpu_custom_call.1} parent=71 // pred_check
          %p499 = pneg %p243
        $region94: #{tpu_custom_call.1} parent=71 // pred_check_branch
          %501 = sbr.rel (%p499) target = $region96
        $region95: #{tpu_custom_call.1} parent=71 // pred_region
          %503 = dma.done [#allocation12], 4096
        $region96: #{tpu_custom_call.1} parent=71 // pred_fallthru
          _
        %s504 = sand.u32 %s41, 1
        %s505 = scalar_lea.sflag [#allocation3], %s504
        %s506 = sand.u32 %s41, 1
        %s507 = smul.addr %s506, 16
        %s508 = scalar_lea.vmem [#allocation2], %s507
        %p509 = pneg %p54
        %p510 = pneg %p51
        %p511 = pneg %p75
        %p512 = pneg %p72
        %p513 = pneg %p96
        %p514 = pneg %p93
        %p515 = pneg %p117
        %p516 = pneg %p114
        %p517 = pneg %p138
        %p518 = pneg %p135
        %p519 = pneg %p159
        %p520 = pneg %p156
        %p521 = pneg %p180
        %p522 = pneg %p177
        %p523 = pneg %p201
        %p524 = pneg %p198
        %p525 = pneg %p222
        %p526 = pneg %p219
        %p527 = pneg %p243
        %p528 = pneg %p240
        %p529 = pneg %p264
        %p530 = pneg %p261
        %p531 = pneg %p285
        %p532 = pneg %p282
        %p533 = pneg %p306
        %p534 = pneg %p303
        %p535 = pneg %p332
        %p536 = pneg %p329
        %s537 = sand.u32 %s319, 1
        %s538 = scalar_lea.sflag [#allocation4], %s537
        %s539 = sand.u32 %s319, 1
        %s540 = smul.addr %s539, 16
        %s541 = scalar_lea.vmem [#allocation13], %s540
        %s542 = smul.u32 2, %s33
        %s543 = smul.u32 2, %s33
        %v544 = vld [vmem:[%s473] sm:$0xff]
        %v545 = vld [vmem:[%s473 + $0x8] sm:$0xff]
        %v546 = vld [vmem:[#allocation5] sm:$0xff]
        %v547 = vld [vmem:[#allocation5 + $0x8] sm:$0xff]
        %v548 = vld [vmem:[#allocation5 + $0x10] sm:$0xff]
        %v549 = vld [vmem:[#allocation5 + $0x18] sm:$0xff]
        %v550 = vld [vmem:[#allocation5 + $0x20] sm:$0xff]
        %v551 = vld [vmem:[#allocation5 + $0x28] sm:$0xff]
        %v552 = vld [vmem:[#allocation5 + $0x30] sm:$0xff]
        %v553 = vld [vmem:[#allocation5 + $0x38] sm:$0xff]
        %v554 = vld [vmem:[#allocation5 + $0x40] sm:$0xff]
        %v555 = vld [vmem:[#allocation5 + $0x48] sm:$0xff]
        %v556 = vld [vmem:[#allocation5 + $0x50] sm:$0xff]
        %v557 = vld [vmem:[#allocation5 + $0x58] sm:$0xff]
        %v558 = vld [vmem:[#allocation5 + $0x60] sm:$0xff]
        %v559 = vld [vmem:[#allocation5 + $0x68] sm:$0xff]
        %v560 = vld [vmem:[#allocation5 + $0x70] sm:$0xff]
        %v561 = vld [vmem:[#allocation5 + $0x78] sm:$0xff]
        %v562 = vld [vmem:[#allocation5 + $0x80] sm:$0xff]
        %v563 = vld [vmem:[#allocation5 + $0x88] sm:$0xff]
        %v564 = vld [vmem:[#allocation5 + $0x90] sm:$0xff]
        %v565 = vld [vmem:[#allocation5 + $0x98] sm:$0xff]
        %v566 = vld [vmem:[#allocation5 + $0xa0] sm:$0xff]
        %v567 = vld [vmem:[#allocation5 + $0xa8] sm:$0xff]
        %v568 = vld [vmem:[#allocation5 + $0xb0] sm:$0xff]
        %v569 = vld [vmem:[#allocation5 + $0xb8] sm:$0xff]
        %v570 = vld [vmem:[#allocation5 + $0xc0] sm:$0xff]
        %v571 = vld [vmem:[#allocation5 + $0xc8] sm:$0xff]
        %v572 = vld [vmem:[#allocation5 + $0xd0] sm:$0xff]
        %v573 = vld [vmem:[#allocation5 + $0xd8] sm:$0xff]
        %v574 = vld [vmem:[#allocation5 + $0xe0] sm:$0xff]
        %v575 = vld [vmem:[#allocation5 + $0xe8] sm:$0xff]
        %v576 = vld [vmem:[#allocation5 + $0xf0] sm:$0xff]
        %v577 = vld [vmem:[#allocation5 + $0xf8] sm:$0xff]
        %v578 = vld [vmem:[#allocation5 + $0x100] sm:$0xff]
        %v579 = vld [vmem:[#allocation5 + $0x108] sm:$0xff]
        %v580 = vld [vmem:[#allocation5 + $0x110] sm:$0xff]
        %v581 = vld [vmem:[#allocation5 + $0x118] sm:$0xff]
        %v582 = vld [vmem:[#allocation5 + $0x120] sm:$0xff]
        %v583 = vld [vmem:[#allocation5 + $0x128] sm:$0xff]
        %v584 = vld [vmem:[#allocation5 + $0x130] sm:$0xff]
        %v585 = vld [vmem:[#allocation5 + $0x138] sm:$0xff]
        %v586 = vld [vmem:[#allocation5 + $0x140] sm:$0xff]
        %v587 = vld [vmem:[#allocation5 + $0x148] sm:$0xff]
        %v588 = vld [vmem:[#allocation5 + $0x150] sm:$0xff]
        %v589 = vld [vmem:[#allocation5 + $0x158] sm:$0xff]
        %v590 = vld [vmem:[#allocation5 + $0x160] sm:$0xff]
        %v591 = vld [vmem:[#allocation5 + $0x168] sm:$0xff]
        %v592 = vld [vmem:[#allocation5 + $0x170] sm:$0xff]
        %v593 = vld [vmem:[#allocation5 + $0x178] sm:$0xff]
        %v594 = vld [vmem:[#allocation7] sm:$0x7]
        %v596 = vperm.slane %v594, 0
        %v597 = vperm.slane %v594, 1
        %v598 = vperm.slane %v594, 2
        %602 = vmatpush.msra.mxu0 %v591
        %603 = vmatpush.msra.mxu0 %v588
        %604 = vmatpush.msra.mxu0 %v585
        %605 = vmatpush.msra.mxu0 %v582
        %606 = vmatpush.msra.mxu0 %v579
        %607 = vmatpush.msra.mxu0 %v576
        %608 = vmatpush.msra.mxu0 %v573
        %609 = vmatpush.msra.mxu0 %v570
        %610 = vmatpush.msra.mxu0 %v567
        %611 = vmatpush.msra.mxu0 %v564
        %612 = vmatpush.msra.mxu0 %v561
        %613 = vmatpush.msra.mxu0 %v558
        %614 = vmatpush.msra.mxu0 %v555
        %615 = vmatpush.msra.mxu0 %v552
        %616 = vmatpush.msra.mxu0 %v549
        %617 = vmatpush.msra.mxu0 %v546
        %618 = vmatmul.f32.gmra.mxu0 %v544
        %v619 = vpop.f32.mrf.mxu0
        %v620 = vadd.f32 %v596, %v619
        %621 = vmatmul.f32.gmra.mxu0 %v545
        %v622 = vpop.f32.mrf.mxu0
        %v623 = vadd.f32 %v596, %v622
        %624 = vdwg.mxu0
        %625 = vmatpush.msra.mxu0 %v592
        %626 = vmatpush.msra.mxu0 %v589
        %627 = vmatpush.msra.mxu0 %v586
        %628 = vmatpush.msra.mxu0 %v583
        %629 = vmatpush.msra.mxu0 %v580
        %630 = vmatpush.msra.mxu0 %v577
        %631 = vmatpush.msra.mxu0 %v574
        %632 = vmatpush.msra.mxu0 %v571
        %633 = vmatpush.msra.mxu0 %v568
        %634 = vmatpush.msra.mxu0 %v565
        %635 = vmatpush.msra.mxu0 %v562
        %636 = vmatpush.msra.mxu0 %v559
        %637 = vmatpush.msra.mxu0 %v556
        %638 = vmatpush.msra.mxu0 %v553
        %639 = vmatpush.msra.mxu0 %v550
        %640 = vmatpush.msra.mxu0 %v547
        %641 = vmatmul.f32.gmra.mxu0 %v544
        %v642 = vpop.f32.mrf.mxu0
        %v643 = vadd.f32 %v597, %v642
        %644 = vmatmul.f32.gmra.mxu0 %v545
        %v645 = vpop.f32.mrf.mxu0
        %v646 = vadd.f32 %v597, %v645
        %647 = vdwg.mxu0
        %648 = vmatpush.msra.mxu0 %v593
        %649 = vmatpush.msra.mxu0 %v590
        %650 = vmatpush.msra.mxu0 %v587
        %651 = vmatpush.msra.mxu0 %v584
        %652 = vmatpush.msra.mxu0 %v581
        %653 = vmatpush.msra.mxu0 %v578
        %654 = vmatpush.msra.mxu0 %v575
        %655 = vmatpush.msra.mxu0 %v572
        %656 = vmatpush.msra.mxu0 %v569
        %657 = vmatpush.msra.mxu0 %v566
        %658 = vmatpush.msra.mxu0 %v563
        %659 = vmatpush.msra.mxu0 %v560
        %660 = vmatpush.msra.mxu0 %v557
        %661 = vmatpush.msra.mxu0 %v554
        %662 = vmatpush.msra.mxu0 %v551
        %663 = vmatpush.msra.mxu0 %v548
        %664 = vmatmul.f32.gmra.mxu0 %v544
        %v665 = vpop.f32.mrf.mxu0
        %v666 = vadd.f32 %v598, %v665
        %667 = vmatmul.f32.gmra.mxu0 %v545
        %v668 = vpop.f32.mrf.mxu0
        %v669 = vadd.f32 %v598, %v668
        %670 = vdwg.mxu0
        %673 = vrot.lane.b32.xlu0 %v620, 96
        %v674 = vpop.permute.xlu0 %673
        %675 = vrot.lane.b32.xlu0 %v623, 96
        %v676 = vpop.permute.xlu0 %675
        %677 = vrot.lane.b32.xlu0 %v620, 64
        %v678 = vpop.permute.xlu0 %677
        %679 = vrot.lane.b32.xlu0 %v623, 64
        %v680 = vpop.permute.xlu0 %679
        %681 = vrot.lane.b32.xlu0 %v620, 32
        %v682 = vpop.permute.xlu0 %681
        %683 = vrot.lane.b32.xlu0 %v623, 32
        %v684 = vpop.permute.xlu0 %683
        %687 = vrot.lane.b32.xlu0 %v643, 96
        %v688 = vpop.permute.xlu0 %687
        %689 = vrot.lane.b32.xlu0 %v646, 96
        %v690 = vpop.permute.xlu0 %689
        %691 = vrot.lane.b32.xlu0 %v643, 64
        %v692 = vpop.permute.xlu0 %691
        %693 = vrot.lane.b32.xlu0 %v646, 64
        %v694 = vpop.permute.xlu0 %693
        %695 = vrot.lane.b32.xlu0 %v643, 32
        %v696 = vpop.permute.xlu0 %695
        %697 = vrot.lane.b32.xlu0 %v646, 32
        %v698 = vpop.permute.xlu0 %697
        %701 = vrot.lane.b32.xlu0 %v666, 96
        %v702 = vpop.permute.xlu0 %701
        %703 = vrot.lane.b32.xlu0 %v669, 96
        %v704 = vpop.permute.xlu0 %703
        %707 = vrot.lane.b32.xlu0 %v666, 64
        %v708 = vpop.permute.xlu0 %707
        %709 = vrot.lane.b32.xlu0 %v669, 64
        %v710 = vpop.permute.xlu0 %709
        %713 = vrot.lane.b32.xlu0 %v666, 32
        %v714 = vpop.permute.xlu0 %713
        %715 = vrot.lane.b32.xlu0 %v669, 32
        %v716 = vpop.permute.xlu0 %715
        %vm719 = vcmask 261120
        %v720 = vsel %vm719, %v620, 0
        %v722 = vsel %vm719, %v643, 0
        %724 = vmatpush.xpose.msra.mxu0 0.0
        %725 = vmatpush.xpose.msra.mxu0 0.0
        %726 = vmatpush.xpose.msra.mxu0 0.0
        %727 = vmatpush.xpose.msra.mxu0 0.0
        %728 = vmatpush.xpose.msra.mxu0 0.0
        %729 = vmatpush.xpose.msra.mxu0 0.0
        %730 = vmatpush.xpose.msra.mxu0 0.0
        %731 = vmatpush.xpose.msra.mxu0 0.0
        %732 = vmatpush.xpose.msra.mxu0 0.0
        %733 = vmatpush.xpose.msra.mxu0 0.0
        %734 = vmatpush.xpose.msra.mxu0 0.0
        %735 = vmatpush.xpose.msra.mxu0 0.0
        %736 = vmatpush.xpose.msra.mxu0 0.0
        %737 = vmatpush.xpose.msra.mxu0 0.0
        %738 = vmatpush.xpose.msra.mxu0 0.0
        %739 = vmatpush.xpose.msra.mxu0 %v722
        %740 = vmatmul.f32.gmra.mxu0 %v720
        %v741 = vpop.f32.mrf.mxu0
        %v742 = vadd.f32 0.0, %v741
        %743 = vdwg.mxu0
        %v744 = vsel %vm719, %v623, 0
        %v746 = vsel %vm719, %v646, 0
        %748 = vmatpush.xpose.msra.mxu0 0.0
        %749 = vmatpush.xpose.msra.mxu0 0.0
        %750 = vmatpush.xpose.msra.mxu0 0.0
        %751 = vmatpush.xpose.msra.mxu0 0.0
        %752 = vmatpush.xpose.msra.mxu0 0.0
        %753 = vmatpush.xpose.msra.mxu0 0.0
        %754 = vmatpush.xpose.msra.mxu0 0.0
        %755 = vmatpush.xpose.msra.mxu0 0.0
        %756 = vmatpush.xpose.msra.mxu0 0.0
        %757 = vmatpush.xpose.msra.mxu0 0.0
        %758 = vmatpush.xpose.msra.mxu0 0.0
        %759 = vmatpush.xpose.msra.mxu0 0.0
        %760 = vmatpush.xpose.msra.mxu0 0.0
        %761 = vmatpush.xpose.msra.mxu0 0.0
        %762 = vmatpush.xpose.msra.mxu0 0.0
        %763 = vmatpush.xpose.msra.mxu0 %v746
        %764 = vmatmul.f32.gmra.mxu0 %v744
        %v765 = vpop.f32.mrf.mxu0
        %v766 = vadd.f32 0.0, %v765
        %767 = vdwg.mxu0
        %v768 = vsel %vm719, %v674, 0
        %v770 = vsel %vm719, %v688, 0
        %772 = vmatpush.xpose.msra.mxu0 0.0
        %773 = vmatpush.xpose.msra.mxu0 0.0
        %774 = vmatpush.xpose.msra.mxu0 0.0
        %775 = vmatpush.xpose.msra.mxu0 0.0
        %776 = vmatpush.xpose.msra.mxu0 0.0
        %777 = vmatpush.xpose.msra.mxu0 0.0
        %778 = vmatpush.xpose.msra.mxu0 0.0
        %779 = vmatpush.xpose.msra.mxu0 0.0
        %780 = vmatpush.xpose.msra.mxu0 0.0
        %781 = vmatpush.xpose.msra.mxu0 0.0
        %782 = vmatpush.xpose.msra.mxu0 0.0
        %783 = vmatpush.xpose.msra.mxu0 0.0
        %784 = vmatpush.xpose.msra.mxu0 0.0
        %785 = vmatpush.xpose.msra.mxu0 0.0
        %786 = vmatpush.xpose.msra.mxu0 0.0
        %787 = vmatpush.xpose.msra.mxu0 %v770
        %788 = vmatmul.f32.gmra.mxu0 %v768
        %v789 = vpop.f32.mrf.mxu0
        %v790 = vadd.f32 0.0, %v789
        %791 = vdwg.mxu0
        %v792 = vsel %vm719, %v676, 0
        %v794 = vsel %vm719, %v690, 0
        %796 = vmatpush.xpose.msra.mxu0 0.0
        %797 = vmatpush.xpose.msra.mxu0 0.0
        %798 = vmatpush.xpose.msra.mxu0 0.0
        %799 = vmatpush.xpose.msra.mxu0 0.0
        %800 = vmatpush.xpose.msra.mxu0 0.0
        %801 = vmatpush.xpose.msra.mxu0 0.0
        %802 = vmatpush.xpose.msra.mxu0 0.0
        %803 = vmatpush.xpose.msra.mxu0 0.0
        %804 = vmatpush.xpose.msra.mxu0 0.0
        %805 = vmatpush.xpose.msra.mxu0 0.0
        %806 = vmatpush.xpose.msra.mxu0 0.0
        %807 = vmatpush.xpose.msra.mxu0 0.0
        %808 = vmatpush.xpose.msra.mxu0 0.0
        %809 = vmatpush.xpose.msra.mxu0 0.0
        %810 = vmatpush.xpose.msra.mxu0 0.0
        %811 = vmatpush.xpose.msra.mxu0 %v794
        %812 = vmatmul.f32.gmra.mxu0 %v792
        %v813 = vpop.f32.mrf.mxu0
        %v814 = vadd.f32 0.0, %v813
        %815 = vdwg.mxu0
        %v816 = vsel %vm719, %v678, 0
        %v818 = vsel %vm719, %v692, 0
        %820 = vmatpush.xpose.msra.mxu0 0.0
        %821 = vmatpush.xpose.msra.mxu0 0.0
        %822 = vmatpush.xpose.msra.mxu0 0.0
        %823 = vmatpush.xpose.msra.mxu0 0.0
        %824 = vmatpush.xpose.msra.mxu0 0.0
        %825 = vmatpush.xpose.msra.mxu0 0.0
        %826 = vmatpush.xpose.msra.mxu0 0.0
        %827 = vmatpush.xpose.msra.mxu0 0.0
        %828 = vmatpush.xpose.msra.mxu0 0.0
        %829 = vmatpush.xpose.msra.mxu0 0.0
        %830 = vmatpush.xpose.msra.mxu0 0.0
        %831 = vmatpush.xpose.msra.mxu0 0.0
        %832 = vmatpush.xpose.msra.mxu0 0.0
        %833 = vmatpush.xpose.msra.mxu0 0.0
        %834 = vmatpush.xpose.msra.mxu0 0.0
        %835 = vmatpush.xpose.msra.mxu0 %v818
        %836 = vmatmul.f32.gmra.mxu0 %v816
        %v837 = vpop.f32.mrf.mxu0
        %v838 = vadd.f32 0.0, %v837
        %839 = vdwg.mxu0
        %v840 = vsel %vm719, %v680, 0
        %v842 = vsel %vm719, %v694, 0
        %844 = vmatpush.xpose.msra.mxu0 0.0
        %845 = vmatpush.xpose.msra.mxu0 0.0
        %846 = vmatpush.xpose.msra.mxu0 0.0
        %847 = vmatpush.xpose.msra.mxu0 0.0
        %848 = vmatpush.xpose.msra.mxu0 0.0
        %849 = vmatpush.xpose.msra.mxu0 0.0
        %850 = vmatpush.xpose.msra.mxu0 0.0
        %851 = vmatpush.xpose.msra.mxu0 0.0
        %852 = vmatpush.xpose.msra.mxu0 0.0
        %853 = vmatpush.xpose.msra.mxu0 0.0
        %854 = vmatpush.xpose.msra.mxu0 0.0
        %855 = vmatpush.xpose.msra.mxu0 0.0
        %856 = vmatpush.xpose.msra.mxu0 0.0
        %857 = vmatpush.xpose.msra.mxu0 0.0
        %858 = vmatpush.xpose.msra.mxu0 0.0
        %859 = vmatpush.xpose.msra.mxu0 %v842
        %860 = vmatmul.f32.gmra.mxu0 %v840
        %v861 = vpop.f32.mrf.mxu0
        %v862 = vadd.f32 0.0, %v861
        %863 = vdwg.mxu0
        %v864 = vsel %vm719, %v682, 0
        %v866 = vsel %vm719, %v696, 0
        %868 = vmatpush.xpose.msra.mxu0 0.0
        %869 = vmatpush.xpose.msra.mxu0 0.0
        %870 = vmatpush.xpose.msra.mxu0 0.0
        %871 = vmatpush.xpose.msra.mxu0 0.0
        %872 = vmatpush.xpose.msra.mxu0 0.0
        %873 = vmatpush.xpose.msra.mxu0 0.0
        %874 = vmatpush.xpose.msra.mxu0 0.0
        %875 = vmatpush.xpose.msra.mxu0 0.0
        %876 = vmatpush.xpose.msra.mxu0 0.0
        %877 = vmatpush.xpose.msra.mxu0 0.0
        %878 = vmatpush.xpose.msra.mxu0 0.0
        %879 = vmatpush.xpose.msra.mxu0 0.0
        %880 = vmatpush.xpose.msra.mxu0 0.0
        %881 = vmatpush.xpose.msra.mxu0 0.0
        %882 = vmatpush.xpose.msra.mxu0 0.0
        %883 = vmatpush.xpose.msra.mxu0 %v866
        %884 = vmatmul.f32.gmra.mxu0 %v864
        %v885 = vpop.f32.mrf.mxu0
        %v886 = vadd.f32 0.0, %v885
        %887 = vdwg.mxu0
        %v888 = vsel %vm719, %v684, 0
        %v890 = vsel %vm719, %v698, 0
        %892 = vmatpush.xpose.msra.mxu0 0.0
        %893 = vmatpush.xpose.msra.mxu0 0.0
        %894 = vmatpush.xpose.msra.mxu0 0.0
        %895 = vmatpush.xpose.msra.mxu0 0.0
        %896 = vmatpush.xpose.msra.mxu0 0.0
        %897 = vmatpush.xpose.msra.mxu0 0.0
        %898 = vmatpush.xpose.msra.mxu0 0.0
        %899 = vmatpush.xpose.msra.mxu0 0.0
        %900 = vmatpush.xpose.msra.mxu0 0.0
        %901 = vmatpush.xpose.msra.mxu0 0.0
        %902 = vmatpush.xpose.msra.mxu0 0.0
        %903 = vmatpush.xpose.msra.mxu0 0.0
        %904 = vmatpush.xpose.msra.mxu0 0.0
        %905 = vmatpush.xpose.msra.mxu0 0.0
        %906 = vmatpush.xpose.msra.mxu0 0.0
        %907 = vmatpush.xpose.msra.mxu0 %v890
        %908 = vmatmul.f32.gmra.mxu0 %v888
        %v909 = vpop.f32.mrf.mxu0
        %v910 = vadd.f32 0.0, %v909
        %911 = vdwg.mxu0
        %vm912 = vcmask 64512
        %v913 = vsel %vm912, %v742, -inf
        %914 = vmax.xlane.f32.xlu0 %v913
        %v915 = vpop.xlane.xlu0 %914
        %v916 = vsel %vm912, %v766, -inf
        %917 = vmax.xlane.f32.xlu0 %v916
        %v918 = vpop.xlane.xlu0 %917
        %v919 = vsel %vm912, %v790, -inf
        %920 = vmax.xlane.f32.xlu0 %v919
        %v921 = vpop.xlane.xlu0 %920
        %v922 = vsel %vm912, %v814, -inf
        %923 = vmax.xlane.f32.xlu0 %v922
        %v924 = vpop.xlane.xlu0 %923
        %v925 = vsel %vm912, %v838, -inf
        %926 = vmax.xlane.f32.xlu0 %v925
        %v927 = vpop.xlane.xlu0 %926
        %v928 = vsel %vm912, %v862, -inf
        %929 = vmax.xlane.f32.xlu0 %v928
        %v930 = vpop.xlane.xlu0 %929
        %v931 = vsel %vm912, %v886, -inf
        %932 = vmax.xlane.f32.xlu0 %v931
        %v933 = vpop.xlane.xlu0 %932
        %v934 = vsel %vm912, %v910, -inf
        %935 = vmax.xlane.f32.xlu0 %v934
        %v936 = vpop.xlane.xlu0 %935
        %v937 = vsub.f32 %v742, %v915
        %v938 = vsub.f32 %v766, %v918
        %v939 = vsub.f32 %v790, %v921
        %v940 = vsub.f32 %v814, %v924
        %v941 = vsub.f32 %v838, %v927
        %v942 = vsub.f32 %v862, %v930
        %v943 = vsub.f32 %v886, %v933
        %v944 = vsub.f32 %v910, %v936
        %v945 = vmul.f32 %v937, 1.442695
        %v946 = vpow.pop %v945
        %v947 = vmul.f32 %v938, 1.442695
        %v948 = vpow.pop %v947
        %v949 = vmul.f32 %v939, 1.442695
        %v950 = vpow.pop %v949
        %v951 = vmul.f32 %v940, 1.442695
        %v952 = vpow.pop %v951
        %v953 = vmul.f32 %v941, 1.442695
        %v954 = vpow.pop %v953
        %v955 = vmul.f32 %v942, 1.442695
        %v956 = vpow.pop %v955
        %v957 = vmul.f32 %v943, 1.442695
        %v958 = vpow.pop %v957
        %v959 = vmul.f32 %v944, 1.442695
        %v960 = vpow.pop %v959
        %v961 = vsel %vm912, %v946, 0.0
        %962 = vadd.xlane.f32.xlu0 %v961
        %v963 = vpop.xlane.xlu0 %962
        %v964 = vsel %vm912, %v948, 0.0
        %965 = vadd.xlane.f32.xlu0 %v964
        %v966 = vpop.xlane.xlu0 %965
        %v967 = vsel %vm912, %v950, 0.0
        %968 = vadd.xlane.f32.xlu0 %v967
        %v969 = vpop.xlane.xlu0 %968
        %v970 = vsel %vm912, %v952, 0.0
        %971 = vadd.xlane.f32.xlu0 %v970
        %v972 = vpop.xlane.xlu0 %971
        %v973 = vsel %vm912, %v954, 0.0
        %974 = vadd.xlane.f32.xlu0 %v973
        %v975 = vpop.xlane.xlu0 %974
        %v976 = vsel %vm912, %v956, 0.0
        %977 = vadd.xlane.f32.xlu0 %v976
        %v978 = vpop.xlane.xlu0 %977
        %v979 = vsel %vm912, %v958, 0.0
        %980 = vadd.xlane.f32.xlu0 %v979
        %v981 = vpop.xlane.xlu0 %980
        %v982 = vsel %vm912, %v960, 0.0
        %983 = vadd.xlane.f32.xlu0 %v982
        %v984 = vpop.xlane.xlu0 %983
        %v985 = vrcp.pop %v963
        %v986 = vrcp.pop %v966
        %v987 = vrcp.pop %v969
        %v988 = vrcp.pop %v972
        %v989 = vrcp.pop %v975
        %v990 = vrcp.pop %v978
        %v991 = vrcp.pop %v981
        %v992 = vrcp.pop %v984
        %v993 = vmul.f32 %v946, %v985
        %v994 = vmul.f32 %v948, %v986
        %v995 = vmul.f32 %v950, %v987
        %v996 = vmul.f32 %v952, %v988
        %v997 = vmul.f32 %v954, %v989
        %v998 = vmul.f32 %v956, %v990
        %v999 = vmul.f32 %v958, %v991
        %v1000 = vmul.f32 %v960, %v992
        %v1002 = vsel %vm912, %v993, 0
        %1004 = vmatpush.msra.mxu0 0.0
        %1005 = vmatpush.msra.mxu0 0.0
        %1006 = vmatpush.msra.mxu0 0.0
        %1007 = vmatpush.msra.mxu0 0.0
        %1008 = vmatpush.msra.mxu0 0.0
        %1009 = vmatpush.msra.mxu0 0.0
        %1010 = vmatpush.msra.mxu0 0.0
        %1011 = vmatpush.msra.mxu0 0.0
        %1012 = vmatpush.msra.mxu0 0.0
        %1013 = vmatpush.msra.mxu0 0.0
        %1014 = vmatpush.msra.mxu0 0.0
        %1015 = vmatpush.msra.mxu0 0.0
        %1016 = vmatpush.msra.mxu0 0.0
        %1017 = vmatpush.msra.mxu0 0.0
        %1018 = vmatpush.msra.mxu0 0.0
        %1019 = vmatpush.msra.mxu0 %v666
        %1020 = vmatmul.f32.gmra.mxu0 %v1002
        %v1021 = vpop.f32.mrf.mxu0
        %v1022 = vadd.f32 0.0, %v1021
        %1023 = vdwg.mxu0
        %v1025 = vsel %vm912, %v994, 0
        %1027 = vmatpush.msra.mxu0 0.0
        %1028 = vmatpush.msra.mxu0 0.0
        %1029 = vmatpush.msra.mxu0 0.0
        %1030 = vmatpush.msra.mxu0 0.0
        %1031 = vmatpush.msra.mxu0 0.0
        %1032 = vmatpush.msra.mxu0 0.0
        %1033 = vmatpush.msra.mxu0 0.0
        %1034 = vmatpush.msra.mxu0 0.0
        %1035 = vmatpush.msra.mxu0 0.0
        %1036 = vmatpush.msra.mxu0 0.0
        %1037 = vmatpush.msra.mxu0 0.0
        %1038 = vmatpush.msra.mxu0 0.0
        %1039 = vmatpush.msra.mxu0 0.0
        %1040 = vmatpush.msra.mxu0 0.0
        %1041 = vmatpush.msra.mxu0 0.0
        %1042 = vmatpush.msra.mxu0 %v669
        %1043 = vmatmul.f32.gmra.mxu0 %v1025
        %v1044 = vpop.f32.mrf.mxu0
        %v1045 = vadd.f32 0.0, %v1044
        %1046 = vdwg.mxu0
        %v1048 = vsel %vm912, %v995, 0
        %1050 = vmatpush.msra.mxu0 0.0
        %1051 = vmatpush.msra.mxu0 0.0
        %1052 = vmatpush.msra.mxu0 0.0
        %1053 = vmatpush.msra.mxu0 0.0
        %1054 = vmatpush.msra.mxu0 0.0
        %1055 = vmatpush.msra.mxu0 0.0
        %1056 = vmatpush.msra.mxu0 0.0
        %1057 = vmatpush.msra.mxu0 0.0
        %1058 = vmatpush.msra.mxu0 0.0
        %1059 = vmatpush.msra.mxu0 0.0
        %1060 = vmatpush.msra.mxu0 0.0
        %1061 = vmatpush.msra.mxu0 0.0
        %1062 = vmatpush.msra.mxu0 0.0
        %1063 = vmatpush.msra.mxu0 0.0
        %1064 = vmatpush.msra.mxu0 0.0
        %1065 = vmatpush.msra.mxu0 %v702
        %1066 = vmatmul.f32.gmra.mxu0 %v1048
        %v1067 = vpop.f32.mrf.mxu0
        %v1068 = vadd.f32 0.0, %v1067
        %1069 = vdwg.mxu0
        %v1071 = vsel %vm912, %v996, 0
        %1073 = vmatpush.msra.mxu0 0.0
        %1074 = vmatpush.msra.mxu0 0.0
        %1075 = vmatpush.msra.mxu0 0.0
        %1076 = vmatpush.msra.mxu0 0.0
        %1077 = vmatpush.msra.mxu0 0.0
        %1078 = vmatpush.msra.mxu0 0.0
        %1079 = vmatpush.msra.mxu0 0.0
        %1080 = vmatpush.msra.mxu0 0.0
        %1081 = vmatpush.msra.mxu0 0.0
        %1082 = vmatpush.msra.mxu0 0.0
        %1083 = vmatpush.msra.mxu0 0.0
        %1084 = vmatpush.msra.mxu0 0.0
        %1085 = vmatpush.msra.mxu0 0.0
        %1086 = vmatpush.msra.mxu0 0.0
        %1087 = vmatpush.msra.mxu0 0.0
        %1088 = vmatpush.msra.mxu0 %v704
        %1089 = vmatmul.f32.gmra.mxu0 %v1071
        %v1090 = vpop.f32.mrf.mxu0
        %v1091 = vadd.f32 0.0, %v1090
        %1092 = vdwg.mxu0
        %v1094 = vsel %vm912, %v997, 0
        %1096 = vmatpush.msra.mxu0 0.0
        %1097 = vmatpush.msra.mxu0 0.0
        %1098 = vmatpush.msra.mxu0 0.0
        %1099 = vmatpush.msra.mxu0 0.0
        %1100 = vmatpush.msra.mxu0 0.0
        %1101 = vmatpush.msra.mxu0 0.0
        %1102 = vmatpush.msra.mxu0 0.0
        %1103 = vmatpush.msra.mxu0 0.0
        %1104 = vmatpush.msra.mxu0 0.0
        %1105 = vmatpush.msra.mxu0 0.0
        %1106 = vmatpush.msra.mxu0 0.0
        %1107 = vmatpush.msra.mxu0 0.0
        %1108 = vmatpush.msra.mxu0 0.0
        %1109 = vmatpush.msra.mxu0 0.0
        %1110 = vmatpush.msra.mxu0 0.0
        %1111 = vmatpush.msra.mxu0 %v708
        %1112 = vmatmul.f32.gmra.mxu0 %v1094
        %v1113 = vpop.f32.mrf.mxu0
        %v1114 = vadd.f32 0.0, %v1113
        %1115 = vdwg.mxu0
        %v1117 = vsel %vm912, %v998, 0
        %1119 = vmatpush.msra.mxu0 0.0
        %1120 = vmatpush.msra.mxu0 0.0
        %1121 = vmatpush.msra.mxu0 0.0
        %1122 = vmatpush.msra.mxu0 0.0
        %1123 = vmatpush.msra.mxu0 0.0
        %1124 = vmatpush.msra.mxu0 0.0
        %1125 = vmatpush.msra.mxu0 0.0
        %1126 = vmatpush.msra.mxu0 0.0
        %1127 = vmatpush.msra.mxu0 0.0
        %1128 = vmatpush.msra.mxu0 0.0
        %1129 = vmatpush.msra.mxu0 0.0
        %1130 = vmatpush.msra.mxu0 0.0
        %1131 = vmatpush.msra.mxu0 0.0
        %1132 = vmatpush.msra.mxu0 0.0
        %1133 = vmatpush.msra.mxu0 0.0
        %1134 = vmatpush.msra.mxu0 %v710
        %1135 = vmatmul.f32.gmra.mxu0 %v1117
        %v1136 = vpop.f32.mrf.mxu0
        %v1137 = vadd.f32 0.0, %v1136
        %1138 = vdwg.mxu0
        %v1140 = vsel %vm912, %v999, 0
        %1142 = vmatpush.msra.mxu0 0.0
        %1143 = vmatpush.msra.mxu0 0.0
        %1144 = vmatpush.msra.mxu0 0.0
        %1145 = vmatpush.msra.mxu0 0.0
        %1146 = vmatpush.msra.mxu0 0.0
        %1147 = vmatpush.msra.mxu0 0.0
        %1148 = vmatpush.msra.mxu0 0.0
        %1149 = vmatpush.msra.mxu0 0.0
        %1150 = vmatpush.msra.mxu0 0.0
        %1151 = vmatpush.msra.mxu0 0.0
        %1152 = vmatpush.msra.mxu0 0.0
        %1153 = vmatpush.msra.mxu0 0.0
        %1154 = vmatpush.msra.mxu0 0.0
        %1155 = vmatpush.msra.mxu0 0.0
        %1156 = vmatpush.msra.mxu0 0.0
        %1157 = vmatpush.msra.mxu0 %v714
        %1158 = vmatmul.f32.gmra.mxu0 %v1140
        %v1159 = vpop.f32.mrf.mxu0
        %v1160 = vadd.f32 0.0, %v1159
        %1161 = vdwg.mxu0
        %v1163 = vsel %vm912, %v1000, 0
        %1165 = vmatpush.msra.mxu0 0.0
        %1166 = vmatpush.msra.mxu0 0.0
        %1167 = vmatpush.msra.mxu0 0.0
        %1168 = vmatpush.msra.mxu0 0.0
        %1169 = vmatpush.msra.mxu0 0.0
        %1170 = vmatpush.msra.mxu0 0.0
        %1171 = vmatpush.msra.mxu0 0.0
        %1172 = vmatpush.msra.mxu0 0.0
        %1173 = vmatpush.msra.mxu0 0.0
        %1174 = vmatpush.msra.mxu0 0.0
        %1175 = vmatpush.msra.mxu0 0.0
        %1176 = vmatpush.msra.mxu0 0.0
        %1177 = vmatpush.msra.mxu0 0.0
        %1178 = vmatpush.msra.mxu0 0.0
        %1179 = vmatpush.msra.mxu0 0.0
        %1180 = vmatpush.msra.mxu0 %v716
        %1181 = vmatmul.f32.gmra.mxu0 %v1163
        %v1182 = vpop.f32.mrf.mxu0
        %v1183 = vadd.f32 0.0, %v1182
        %1184 = vdwg.mxu0
        %v1185 = vld [vmem:[#allocation8] sm:$0xff]
        %v1186 = vld [vmem:[#allocation8 + $0x8] sm:$0xff]
        %v1187 = vld [vmem:[#allocation8 + $0x10] sm:$0xff]
        %v1188 = vld [vmem:[#allocation8 + $0x18] sm:$0xff]
        %v1189 = vld [vmem:[#allocation8 + $0x20] sm:$0xff]
        %v1190 = vld [vmem:[#allocation8 + $0x28] sm:$0xff]
        %v1191 = vld [vmem:[#allocation8 + $0x30] sm:$0xff]
        %v1192 = vld [vmem:[#allocation8 + $0x38] sm:$0xff]
        %v1193 = vld [vmem:[#allocation8 + $0x40] sm:$0xff]
        %v1194 = vld [vmem:[#allocation8 + $0x48] sm:$0xff]
        %v1195 = vld [vmem:[#allocation8 + $0x50] sm:$0xff]
        %v1196 = vld [vmem:[#allocation8 + $0x58] sm:$0xff]
        %v1197 = vld [vmem:[#allocation8 + $0x60] sm:$0xff]
        %v1198 = vld [vmem:[#allocation8 + $0x68] sm:$0xff]
        %v1199 = vld [vmem:[#allocation8 + $0x70] sm:$0xff]
        %v1200 = vld [vmem:[#allocation8 + $0x78] sm:$0xff]
        %v1202 = vsel %vm719, %v1022, 0
        %v1205 = vsel %vm719, %v1045, 0
        %1207 = vmatpush.msra.mxu0 0.0
        %1208 = vmatpush.msra.mxu0 0.0
        %1209 = vmatpush.msra.mxu0 0.0
        %1210 = vmatpush.msra.mxu0 0.0
        %1211 = vmatpush.msra.mxu0 0.0
        %1212 = vmatpush.msra.mxu0 0.0
        %1213 = vmatpush.msra.mxu0 0.0
        %1214 = vmatpush.msra.mxu0 0.0
        %1215 = vmatpush.msra.mxu0 0.0
        %1216 = vmatpush.msra.mxu0 0.0
        %1217 = vmatpush.msra.mxu0 0.0
        %1218 = vmatpush.msra.mxu0 0.0
        %1219 = vmatpush.msra.mxu0 %v1188
        %1220 = vmatpush.msra.mxu0 %v1187
        %1221 = vmatpush.msra.mxu0 %v1186
        %1222 = vmatpush.msra.mxu0 %v1185
        %1223 = vmatmul.f32.gmra.mxu0 %v1202
        %v1224 = vpop.f32.mrf.mxu0
        %v1225 = vadd.f32 0.0, %v1224
        %1226 = vmatmul.f32.gmra.mxu0 %v1205
        %v1227 = vpop.f32.mrf.mxu0
        %v1228 = vadd.f32 0.0, %v1227
        %1229 = vdwg.mxu0
        %v1231 = vsel %vm719, %v1068, 0
        %v1234 = vsel %vm719, %v1091, 0
        %1236 = vmatpush.msra.mxu0 0.0
        %1237 = vmatpush.msra.mxu0 0.0
        %1238 = vmatpush.msra.mxu0 0.0
        %1239 = vmatpush.msra.mxu0 0.0
        %1240 = vmatpush.msra.mxu0 0.0
        %1241 = vmatpush.msra.mxu0 0.0
        %1242 = vmatpush.msra.mxu0 0.0
        %1243 = vmatpush.msra.mxu0 0.0
        %1244 = vmatpush.msra.mxu0 0.0
        %1245 = vmatpush.msra.mxu0 0.0
        %1246 = vmatpush.msra.mxu0 0.0
        %1247 = vmatpush.msra.mxu0 0.0
        %1248 = vmatpush.msra.mxu0 %v1192
        %1249 = vmatpush.msra.mxu0 %v1191
        %1250 = vmatpush.msra.mxu0 %v1190
        %1251 = vmatpush.msra.mxu0 %v1189
        %1252 = vmatmul.f32.gmra.mxu0 %v1231
        %v1253 = vpop.f32.mrf.mxu0
        %v1254 = vadd.f32 0.0, %v1253
        %1255 = vmatmul.f32.gmra.mxu0 %v1234
        %v1256 = vpop.f32.mrf.mxu0
        %v1257 = vadd.f32 0.0, %v1256
        %1258 = vdwg.mxu0
        %v1260 = vsel %vm719, %v1114, 0
        %v1263 = vsel %vm719, %v1137, 0
        %1265 = vmatpush.msra.mxu0 0.0
        %1266 = vmatpush.msra.mxu0 0.0
        %1267 = vmatpush.msra.mxu0 0.0
        %1268 = vmatpush.msra.mxu0 0.0
        %1269 = vmatpush.msra.mxu0 0.0
        %1270 = vmatpush.msra.mxu0 0.0
        %1271 = vmatpush.msra.mxu0 0.0
        %1272 = vmatpush.msra.mxu0 0.0
        %1273 = vmatpush.msra.mxu0 0.0
        %1274 = vmatpush.msra.mxu0 0.0
        %1275 = vmatpush.msra.mxu0 0.0
        %1276 = vmatpush.msra.mxu0 0.0
        %1277 = vmatpush.msra.mxu0 %v1196
        %1278 = vmatpush.msra.mxu0 %v1195
        %1279 = vmatpush.msra.mxu0 %v1194
        %1280 = vmatpush.msra.mxu0 %v1193
        %1281 = vmatmul.f32.gmra.mxu0 %v1260
        %v1282 = vpop.f32.mrf.mxu0
        %v1283 = vadd.f32 0.0, %v1282
        %1284 = vmatmul.f32.gmra.mxu0 %v1263
        %v1285 = vpop.f32.mrf.mxu0
        %v1286 = vadd.f32 0.0, %v1285
        %1287 = vdwg.mxu0
        %v1289 = vsel %vm719, %v1160, 0
        %v1292 = vsel %vm719, %v1183, 0
        %1294 = vmatpush.msra.mxu0 0.0
        %1295 = vmatpush.msra.mxu0 0.0
        %1296 = vmatpush.msra.mxu0 0.0
        %1297 = vmatpush.msra.mxu0 0.0
        %1298 = vmatpush.msra.mxu0 0.0
        %1299 = vmatpush.msra.mxu0 0.0
        %1300 = vmatpush.msra.mxu0 0.0
        %1301 = vmatpush.msra.mxu0 0.0
        %1302 = vmatpush.msra.mxu0 0.0
        %1303 = vmatpush.msra.mxu0 0.0
        %1304 = vmatpush.msra.mxu0 0.0
        %1305 = vmatpush.msra.mxu0 0.0
        %1306 = vmatpush.msra.mxu0 %v1200
        %1307 = vmatpush.msra.mxu0 %v1199
        %1308 = vmatpush.msra.mxu0 %v1198
        %1309 = vmatpush.msra.mxu0 %v1197
        %1310 = vmatmul.f32.gmra.mxu0 %v1289
        %v1311 = vpop.f32.mrf.mxu0
        %v1312 = vadd.f32 0.0, %v1311
        %1313 = vmatmul.f32.gmra.mxu0 %v1292
        %v1314 = vpop.f32.mrf.mxu0
        %v1315 = vadd.f32 0.0, %v1314
        %1316 = vdwg.mxu0
        %v1317 = vadd.f32 %v1225, %v1254
        %v1318 = vadd.f32 %v1317, %v1283
        %v1319 = vadd.f32 %v1318, %v1312
        %v1320 = vadd.f32 %v1228, %v1257
        %v1321 = vadd.f32 %v1320, %v1286
        %v1322 = vadd.f32 %v1321, %v1315
        %v1323 = vld [vmem:[%s4] sm:$0x1]
        %v1325 = vperm.slane %v1323, 0
        %v1327 = vadd.f32 %v1319, %v1325
        %v1328 = vadd.f32 %v1322, %v1325
        %v1329 = vadd.f32 %v544, %v1327
        %v1330 = vadd.f32 %v545, %v1328
        %v1331 = vld [vmem:[%s5] sm:$0x1]
        %v1332 = vld [vmem:[%s6] sm:$0x1]
        %1333 = vadd.xlane.f32.xlu0 %v1329
        %v1334 = vpop.xlane.xlu0 %1333
        %1335 = vadd.xlane.f32.xlu0 %v1330
        %v1336 = vpop.xlane.xlu0 %1335
        %v1337 = vrcp.pop 128.0
        %v1338 = vmul.f32 128.0, %v1337
        %v1339 = vsub.f32 1.0, %v1338
        %v1340 = vmul.f32 %v1337, %v1339
        %v1341 = vadd.f32 %v1337, %v1340
        %vm1342 = vweird.f32 %v1337
        %v1343 = vsel %vm1342, %v1337, %v1341
        %v1344 = vmul.f32 %v1334, %v1343
        %v1345 = vmul.f32 %v1336, %v1343
        %v1346 = vsub.f32 %v1329, %v1344
        %v1347 = vsub.f32 %v1330, %v1345
        %v1348 = vmul.f32 %v1346, %v1346
        %v1349 = vmul.f32 %v1347, %v1347
        %1350 = vadd.xlane.f32.xlu0 %v1348
        %v1351 = vpop.xlane.xlu0 %1350
        %1352 = vadd.xlane.f32.xlu0 %v1349
        %v1353 = vpop.xlane.xlu0 %1352
        %v1354 = vmul.f32 %v1351, %v1343
        %v1355 = vmul.f32 %v1353, %v1343
        %v1356 = vadd.f32 %v1354, 1e-05
        %v1357 = vadd.f32 %v1355, 1e-05
        %v1358 = vrsqrt.pop %v1356
        %v1359 = vmul.f32 %v1358, %v1356
        %v1360 = vmul.f32 %v1359, %v1358
        %v1361 = vmul.f32 0.5, %v1360
        %v1362 = vsub.f32 1.5, %v1361
        %v1363 = vmul.f32 %v1358, %v1362
        %vm1364 = vweird.f32 %v1356
        %vm1365 = vweird.f32 %v1358
        %vm1366 = vmor %vm1364, %vm1365
        %v1367 = vsel %vm1366, %v1358, %v1363
        %v1368 = vrsqrt.pop %v1357
        %v1369 = vmul.f32 %v1368, %v1357
        %v1370 = vmul.f32 %v1369, %v1368
        %v1371 = vmul.f32 0.5, %v1370
        %v1372 = vsub.f32 1.5, %v1371
        %v1373 = vmul.f32 %v1368, %v1372
        %vm1374 = vweird.f32 %v1357
        %vm1375 = vweird.f32 %v1368
        %vm1376 = vmor %vm1374, %vm1375
        %v1377 = vsel %vm1376, %v1368, %v1373
        %v1378 = vmul.f32 %v1346, %v1367
        %v1379 = vmul.f32 %v1347, %v1377
        %v1381 = vperm.slane %v1331, 0
        %v1383 = vmul.f32 %v1378, %v1381
        %v1384 = vmul.f32 %v1379, %v1381
        %v1386 = vperm.slane %v1332, 0
        %v1388 = vadd.f32 %v1383, %v1386
        %v1389 = vadd.f32 %v1384, %v1386
        %v1390 = vld [vmem:[#allocation10] sm:$0xff]
        %v1391 = vld [vmem:[#allocation10 + $0x8] sm:$0xff]
        %v1392 = vld [vmem:[#allocation10 + $0x10] sm:$0xff]
        %v1393 = vld [vmem:[#allocation10 + $0x18] sm:$0xff]
        %v1394 = vld [vmem:[#allocation10 + $0x20] sm:$0xff]
        %v1395 = vld [vmem:[#allocation10 + $0x28] sm:$0xff]
        %v1396 = vld [vmem:[#allocation10 + $0x30] sm:$0xff]
        %v1397 = vld [vmem:[#allocation10 + $0x38] sm:$0xff]
        %v1398 = vld [vmem:[#allocation10 + $0x40] sm:$0xff]
        %v1399 = vld [vmem:[#allocation10 + $0x48] sm:$0xff]
        %v1400 = vld [vmem:[#allocation10 + $0x50] sm:$0xff]
        %v1401 = vld [vmem:[#allocation10 + $0x58] sm:$0xff]
        %v1402 = vld [vmem:[#allocation10 + $0x60] sm:$0xff]
        %v1403 = vld [vmem:[#allocation10 + $0x68] sm:$0xff]
        %v1404 = vld [vmem:[#allocation10 + $0x70] sm:$0xff]
        %v1405 = vld [vmem:[#allocation10 + $0x78] sm:$0xff]
        %v1406 = vld [vmem:[#allocation10 + $0x80] sm:$0xff]
        %v1407 = vld [vmem:[#allocation10 + $0x88] sm:$0xff]
        %v1408 = vld [vmem:[#allocation10 + $0x90] sm:$0xff]
        %v1409 = vld [vmem:[#allocation10 + $0x98] sm:$0xff]
        %v1410 = vld [vmem:[#allocation10 + $0xa0] sm:$0xff]
        %v1411 = vld [vmem:[#allocation10 + $0xa8] sm:$0xff]
        %v1412 = vld [vmem:[#allocation10 + $0xb0] sm:$0xff]
        %v1413 = vld [vmem:[#allocation10 + $0xb8] sm:$0xff]
        %v1414 = vld [vmem:[#allocation10 + $0xc0] sm:$0xff]
        %v1415 = vld [vmem:[#allocation10 + $0xc8] sm:$0xff]
        %v1416 = vld [vmem:[#allocation10 + $0xd0] sm:$0xff]
        %v1417 = vld [vmem:[#allocation10 + $0xd8] sm:$0xff]
        %v1418 = vld [vmem:[#allocation10 + $0xe0] sm:$0xff]
        %v1419 = vld [vmem:[#allocation10 + $0xe8] sm:$0xff]
        %v1420 = vld [vmem:[#allocation10 + $0xf0] sm:$0xff]
        %v1421 = vld [vmem:[#allocation10 + $0xf8] sm:$0xff]
        %v1422 = vld [vmem:[%s8] sm:$0x3]
        %v1424 = vperm.slane %v1422, 0
        %v1425 = vperm.slane %v1422, 1
        %1428 = vmatpush.msra.mxu0 %v1420
        %1429 = vmatpush.msra.mxu0 %v1418
        %1430 = vmatpush.msra.mxu0 %v1416
        %1431 = vmatpush.msra.mxu0 %v1414
        %1432 = vmatpush.msra.mxu0 %v1412
        %1433 = vmatpush.msra.mxu0 %v1410
        %1434 = vmatpush.msra.mxu0 %v1408
        %1435 = vmatpush.msra.mxu0 %v1406
        %1436 = vmatpush.msra.mxu0 %v1404
        %1437 = vmatpush.msra.mxu0 %v1402
        %1438 = vmatpush.msra.mxu0 %v1400
        %1439 = vmatpush.msra.mxu0 %v1398
        %1440 = vmatpush.msra.mxu0 %v1396
        %1441 = vmatpush.msra.mxu0 %v1394
        %1442 = vmatpush.msra.mxu0 %v1392
        %1443 = vmatpush.msra.mxu0 %v1390
        %1444 = vmatmul.f32.gmra.mxu0 %v1388
        %v1445 = vpop.f32.mrf.mxu0
        %v1446 = vadd.f32 %v1424, %v1445
        %1447 = vmatmul.f32.gmra.mxu0 %v1389
        %v1448 = vpop.f32.mrf.mxu0
        %v1449 = vadd.f32 %v1424, %v1448
        %1450 = vdwg.mxu0
        %1451 = vmatpush.msra.mxu0 %v1421
        %1452 = vmatpush.msra.mxu0 %v1419
        %1453 = vmatpush.msra.mxu0 %v1417
        %1454 = vmatpush.msra.mxu0 %v1415
        %1455 = vmatpush.msra.mxu0 %v1413
        %1456 = vmatpush.msra.mxu0 %v1411
        %1457 = vmatpush.msra.mxu0 %v1409
        %1458 = vmatpush.msra.mxu0 %v1407
        %1459 = vmatpush.msra.mxu0 %v1405
        %1460 = vmatpush.msra.mxu0 %v1403
        %1461 = vmatpush.msra.mxu0 %v1401
        %1462 = vmatpush.msra.mxu0 %v1399
        %1463 = vmatpush.msra.mxu0 %v1397
        %1464 = vmatpush.msra.mxu0 %v1395
        %1465 = vmatpush.msra.mxu0 %v1393
        %1466 = vmatpush.msra.mxu0 %v1391
        %1467 = vmatmul.f32.gmra.mxu0 %v1388
        %v1468 = vpop.f32.mrf.mxu0
        %v1469 = vadd.f32 %v1425, %v1468
        %1470 = vmatmul.f32.gmra.mxu0 %v1389
        %v1471 = vpop.f32.mrf.mxu0
        %v1472 = vadd.f32 %v1425, %v1471
        %1473 = vdwg.mxu0
        %v1474 = vmul.f32 %v1446, 0.5
        %v1475 = vmul.f32 %v1469, 0.5
        %v1476 = vmul.f32 %v1449, 0.5
        %v1477 = vmul.f32 %v1472, 0.5
        %v1478 = vmul.f32 %v1446, 0.70710677
        %v1479 = vmul.f32 %v1469, 0.70710677
        %v1480 = vmul.f32 %v1449, 0.70710677
        %v1481 = vmul.f32 %v1472, 0.70710677
        %v1482 = vmul.f32 %v1478, %v1478
        %v1483 = vmin.f32 16.0, %v1482
        %v1484 = vmul.f32 %v1483, 2.1237322e-06
        %v1485 = vadd.f32 %v1484, 0.00028619796
        %v1486 = vmul.f32 %v1483, %v1485
        %v1487 = vadd.f32 %v1486, 0.0036580483
        %v1488 = vmul.f32 %v1483, %v1487
        %v1489 = vadd.f32 %v1488, 0.05243302
        %v1490 = vmul.f32 %v1483, %v1489
        %v1491 = vadd.f32 %v1490, 0.18741608
        %v1492 = vmul.f32 %v1483, %v1491
        %v1493 = vadd.f32 %v1492, 1.1283791
        %v1494 = vmul.f32 %v1478, %v1493
        %v1495 = vmul.f32 %v1483, 3.8918573e-05
        %v1496 = vadd.f32 %v1495, 0.001143296
        %v1497 = vmul.f32 %v1483, %v1496
        %v1498 = vadd.f32 %v1497, 0.014752088
        %v1499 = vmul.f32 %v1483, %v1498
        %v1500 = vadd.f32 %v1499, 0.112945676
        %v1501 = vmul.f32 %v1483, %v1500
        %v1502 = vadd.f32 %v1501, 0.4994258
        %v1503 = vmul.f32 %v1483, %v1502
        %v1504 = vadd.f32 %v1503, 1.0
        %v1505 = vrcp.pop %v1504
        %v1506 = vmul.f32 %v1504, %v1505
        %v1507 = vsub.f32 1.0, %v1506
        %v1508 = vmul.f32 %v1505, %v1507
        %v1509 = vadd.f32 %v1505, %v1508
        %vm1510 = vweird.f32 %v1504
        %vm1511 = vweird.f32 %v1505
        %vm1512 = vmor %vm1510, %vm1511
        %v1513 = vsel %vm1512, %v1505, %v1509
        %v1514 = vand.u32 2147483647, %v1504
        %vm1515 = vcmp.eq.f32.partialorder %v1514, 8.507059e+37
        %v1516 = vand.u32 %v1504, 2147483648
        %v1517 = vor.u32 1.1754944e-38, %v1516
        %v1518 = vsel %vm1515, %v1517, %v1513
        %v1519 = vmul.f32 %v1494, %v1518
        %v1520 = vmin.f32 %v1519, 1.0
        %v1521 = vmax.f32 %v1520, -1.0
        %v1522 = vmul.f32 %v1479, %v1479
        %v1523 = vmin.f32 16.0, %v1522
        %v1524 = vmul.f32 %v1523, 2.1237322e-06
        %v1525 = vadd.f32 %v1524, 0.00028619796
        %v1526 = vmul.f32 %v1523, %v1525
        %v1527 = vadd.f32 %v1526, 0.0036580483
        %v1528 = vmul.f32 %v1523, %v1527
        %v1529 = vadd.f32 %v1528, 0.05243302
        %v1530 = vmul.f32 %v1523, %v1529
        %v1531 = vadd.f32 %v1530, 0.18741608
        %v1532 = vmul.f32 %v1523, %v1531
        %v1533 = vadd.f32 %v1532, 1.1283791
        %v1534 = vmul.f32 %v1479, %v1533
        %v1535 = vmul.f32 %v1523, 3.8918573e-05
        %v1536 = vadd.f32 %v1535, 0.001143296
        %v1537 = vmul.f32 %v1523, %v1536
        %v1538 = vadd.f32 %v1537, 0.014752088
        %v1539 = vmul.f32 %v1523, %v1538
        %v1540 = vadd.f32 %v1539, 0.112945676
        %v1541 = vmul.f32 %v1523, %v1540
        %v1542 = vadd.f32 %v1541, 0.4994258
        %v1543 = vmul.f32 %v1523, %v1542
        %v1544 = vadd.f32 %v1543, 1.0
        %v1545 = vrcp.pop %v1544
        %v1546 = vmul.f32 %v1544, %v1545
        %v1547 = vsub.f32 1.0, %v1546
        %v1548 = vmul.f32 %v1545, %v1547
        %v1549 = vadd.f32 %v1545, %v1548
        %vm1550 = vweird.f32 %v1544
        %vm1551 = vweird.f32 %v1545
        %vm1552 = vmor %vm1550, %vm1551
        %v1553 = vsel %vm1552, %v1545, %v1549
        %v1554 = vand.u32 2147483647, %v1544
        %vm1555 = vcmp.eq.f32.partialorder %v1554, 8.507059e+37
        %v1556 = vand.u32 %v1544, 2147483648
        %v1557 = vor.u32 1.1754944e-38, %v1556
        %v1558 = vsel %vm1555, %v1557, %v1553
        %v1559 = vmul.f32 %v1534, %v1558
        %v1560 = vmin.f32 %v1559, 1.0
        %v1561 = vmax.f32 %v1560, -1.0
        %v1562 = vmul.f32 %v1480, %v1480
        %v1563 = vmin.f32 16.0, %v1562
        %v1564 = vmul.f32 %v1563, 2.1237322e-06
        %v1565 = vadd.f32 %v1564, 0.00028619796
        %v1566 = vmul.f32 %v1563, %v1565
        %v1567 = vadd.f32 %v1566, 0.0036580483
        %v1568 = vmul.f32 %v1563, %v1567
        %v1569 = vadd.f32 %v1568, 0.05243302
        %v1570 = vmul.f32 %v1563, %v1569
        %v1571 = vadd.f32 %v1570, 0.18741608
        %v1572 = vmul.f32 %v1563, %v1571
        %v1573 = vadd.f32 %v1572, 1.1283791
        %v1574 = vmul.f32 %v1480, %v1573
        %v1575 = vmul.f32 %v1563, 3.8918573e-05
        %v1576 = vadd.f32 %v1575, 0.001143296
        %v1577 = vmul.f32 %v1563, %v1576
        %v1578 = vadd.f32 %v1577, 0.014752088
        %v1579 = vmul.f32 %v1563, %v1578
        %v1580 = vadd.f32 %v1579, 0.112945676
        %v1581 = vmul.f32 %v1563, %v1580
        %v1582 = vadd.f32 %v1581, 0.4994258
        %v1583 = vmul.f32 %v1563, %v1582
        %v1584 = vadd.f32 %v1583, 1.0
        %v1585 = vrcp.pop %v1584
        %v1586 = vmul.f32 %v1584, %v1585
        %v1587 = vsub.f32 1.0, %v1586
        %v1588 = vmul.f32 %v1585, %v1587
        %v1589 = vadd.f32 %v1585, %v1588
        %vm1590 = vweird.f32 %v1584
        %vm1591 = vweird.f32 %v1585
        %vm1592 = vmor %vm1590, %vm1591
        %v1593 = vsel %vm1592, %v1585, %v1589
        %v1594 = vand.u32 2147483647, %v1584
        %vm1595 = vcmp.eq.f32.partialorder %v1594, 8.507059e+37
        %v1596 = vand.u32 %v1584, 2147483648
        %v1597 = vor.u32 1.1754944e-38, %v1596
        %v1598 = vsel %vm1595, %v1597, %v1593
        %v1599 = vmul.f32 %v1574, %v1598
        %v1600 = vmin.f32 %v1599, 1.0
        %v1601 = vmax.f32 %v1600, -1.0
        %v1602 = vmul.f32 %v1481, %v1481
        %v1603 = vmin.f32 16.0, %v1602
        %v1604 = vmul.f32 %v1603, 2.1237322e-06
        %v1605 = vadd.f32 %v1604, 0.00028619796
        %v1606 = vmul.f32 %v1603, %v1605
        %v1607 = vadd.f32 %v1606, 0.0036580483
        %v1608 = vmul.f32 %v1603, %v1607
        %v1609 = vadd.f32 %v1608, 0.05243302
        %v1610 = vmul.f32 %v1603, %v1609
        %v1611 = vadd.f32 %v1610, 0.18741608
        %v1612 = vmul.f32 %v1603, %v1611
        %v1613 = vadd.f32 %v1612, 1.1283791
        %v1614 = vmul.f32 %v1481, %v1613
        %v1615 = vmul.f32 %v1603, 3.8918573e-05
        %v1616 = vadd.f32 %v1615, 0.001143296
        %v1617 = vmul.f32 %v1603, %v1616
        %v1618 = vadd.f32 %v1617, 0.014752088
        %v1619 = vmul.f32 %v1603, %v1618
        %v1620 = vadd.f32 %v1619, 0.112945676
        %v1621 = vmul.f32 %v1603, %v1620
        %v1622 = vadd.f32 %v1621, 0.4994258
        %v1623 = vmul.f32 %v1603, %v1622
        %v1624 = vadd.f32 %v1623, 1.0
        %v1625 = vrcp.pop %v1624
        %v1626 = vmul.f32 %v1624, %v1625
        %v1627 = vsub.f32 1.0, %v1626
        %v1628 = vmul.f32 %v1625, %v1627
        %v1629 = vadd.f32 %v1625, %v1628
        %vm1630 = vweird.f32 %v1624
        %vm1631 = vweird.f32 %v1625
        %vm1632 = vmor %vm1630, %vm1631
        %v1633 = vsel %vm1632, %v1625, %v1629
        %v1634 = vand.u32 2147483647, %v1624
        %vm1635 = vcmp.eq.f32.partialorder %v1634, 8.507059e+37
        %v1636 = vand.u32 %v1624, 2147483648
        %v1637 = vor.u32 1.1754944e-38, %v1636
        %v1638 = vsel %vm1635, %v1637, %v1633
        %v1639 = vmul.f32 %v1614, %v1638
        %v1640 = vmin.f32 %v1639, 1.0
        %v1641 = vmax.f32 %v1640, -1.0
        %v1642 = vadd.f32 %v1521, 1.0
        %v1643 = vadd.f32 %v1561, 1.0
        %v1644 = vadd.f32 %v1601, 1.0
        %v1645 = vadd.f32 %v1641, 1.0
        %v1646 = vmul.f32 %v1474, %v1642
        %v1647 = vmul.f32 %v1475, %v1643
        %v1648 = vmul.f32 %v1476, %v1644
        %v1649 = vmul.f32 %v1477, %v1645
        %v1650 = vld [vmem:[#allocation11] sm:$0xff]
        %v1651 = vld [vmem:[#allocation11 + $0x8] sm:$0xff]
        %v1652 = vld [vmem:[#allocation11 + $0x10] sm:$0xff]
        %v1653 = vld [vmem:[#allocation11 + $0x18] sm:$0xff]
        %v1654 = vld [vmem:[#allocation11 + $0x20] sm:$0xff]
        %v1655 = vld [vmem:[#allocation11 + $0x28] sm:$0xff]
        %v1656 = vld [vmem:[#allocation11 + $0x30] sm:$0xff]
        %v1657 = vld [vmem:[#allocation11 + $0x38] sm:$0xff]
        %v1658 = vld [vmem:[#allocation11 + $0x40] sm:$0xff]
        %v1659 = vld [vmem:[#allocation11 + $0x48] sm:$0xff]
        %v1660 = vld [vmem:[#allocation11 + $0x50] sm:$0xff]
        %v1661 = vld [vmem:[#allocation11 + $0x58] sm:$0xff]
        %v1662 = vld [vmem:[#allocation11 + $0x60] sm:$0xff]
        %v1663 = vld [vmem:[#allocation11 + $0x68] sm:$0xff]
        %v1664 = vld [vmem:[#allocation11 + $0x70] sm:$0xff]
        %v1665 = vld [vmem:[#allocation11 + $0x78] sm:$0xff]
        %v1666 = vld [vmem:[#allocation11 + $0x80] sm:$0xff]
        %v1667 = vld [vmem:[#allocation11 + $0x88] sm:$0xff]
        %v1668 = vld [vmem:[#allocation11 + $0x90] sm:$0xff]
        %v1669 = vld [vmem:[#allocation11 + $0x98] sm:$0xff]
        %v1670 = vld [vmem:[#allocation11 + $0xa0] sm:$0xff]
        %v1671 = vld [vmem:[#allocation11 + $0xa8] sm:$0xff]
        %v1672 = vld [vmem:[#allocation11 + $0xb0] sm:$0xff]
        %v1673 = vld [vmem:[#allocation11 + $0xb8] sm:$0xff]
        %v1674 = vld [vmem:[#allocation11 + $0xc0] sm:$0xff]
        %v1675 = vld [vmem:[#allocation11 + $0xc8] sm:$0xff]
        %v1676 = vld [vmem:[#allocation11 + $0xd0] sm:$0xff]
        %v1677 = vld [vmem:[#allocation11 + $0xd8] sm:$0xff]
        %v1678 = vld [vmem:[#allocation11 + $0xe0] sm:$0xff]
        %v1679 = vld [vmem:[#allocation11 + $0xe8] sm:$0xff]
        %v1680 = vld [vmem:[#allocation11 + $0xf0] sm:$0xff]
        %v1681 = vld [vmem:[#allocation11 + $0xf8] sm:$0xff]
        %v1682 = vld [vmem:[%s10] sm:$0x1]
        %v1684 = vperm.slane %v1682, 0
        %1686 = vmatpush.msra.mxu0 %v1665
        %1687 = vmatpush.msra.mxu0 %v1664
        %1688 = vmatpush.msra.mxu0 %v1663
        %1689 = vmatpush.msra.mxu0 %v1662
        %1690 = vmatpush.msra.mxu0 %v1661
        %1691 = vmatpush.msra.mxu0 %v1660
        %1692 = vmatpush.msra.mxu0 %v1659
        %1693 = vmatpush.msra.mxu0 %v1658
        %1694 = vmatpush.msra.mxu0 %v1657
        %1695 = vmatpush.msra.mxu0 %v1656
        %1696 = vmatpush.msra.mxu0 %v1655
        %1697 = vmatpush.msra.mxu0 %v1654
        %1698 = vmatpush.msra.mxu0 %v1653
        %1699 = vmatpush.msra.mxu0 %v1652
        %1700 = vmatpush.msra.mxu0 %v1651
        %1701 = vmatpush.msra.mxu0 %v1650
        %1702 = vmatmul.f32.gmra.mxu0 %v1646
        %v1703 = vpop.f32.mrf.mxu0
        %v1704 = vadd.f32 %v1684, %v1703
        %1705 = vmatmul.f32.gmra.mxu0 %v1648
        %v1706 = vpop.f32.mrf.mxu0
        %v1707 = vadd.f32 %v1684, %v1706
        %1708 = vdwg.mxu0
        %1709 = vmatpush.msra.mxu0 %v1681
        %1710 = vmatpush.msra.mxu0 %v1680
        %1711 = vmatpush.msra.mxu0 %v1679
        %1712 = vmatpush.msra.mxu0 %v1678
        %1713 = vmatpush.msra.mxu0 %v1677
        %1714 = vmatpush.msra.mxu0 %v1676
        %1715 = vmatpush.msra.mxu0 %v1675
        %1716 = vmatpush.msra.mxu0 %v1674
        %1717 = vmatpush.msra.mxu0 %v1673
        %1718 = vmatpush.msra.mxu0 %v1672
        %1719 = vmatpush.msra.mxu0 %v1671
        %1720 = vmatpush.msra.mxu0 %v1670
        %1721 = vmatpush.msra.mxu0 %v1669
        %1722 = vmatpush.msra.mxu0 %v1668
        %1723 = vmatpush.msra.mxu0 %v1667
        %1724 = vmatpush.msra.mxu0 %v1666
        %1725 = vmatmul.f32.gmra.mxu0 %v1647
        %v1726 = vpop.f32.mrf.mxu0
        %v1727 = vadd.f32 %v1704, %v1726
        %1728 = vmatmul.f32.gmra.mxu0 %v1649
        %v1729 = vpop.f32.mrf.mxu0
        %v1730 = vadd.f32 %v1707, %v1729
        %1731 = vdwg.mxu0
        %v1732 = vadd.f32 %v1388, %v1727
        %v1733 = vadd.f32 %v1389, %v1730
        %v1734 = vld [vmem:[%s11] sm:$0x1]
        %v1735 = vld [vmem:[%s12] sm:$0x1]
        %1736 = vadd.xlane.f32.xlu0 %v1732
        %v1737 = vpop.xlane.xlu0 %1736
        %1738 = vadd.xlane.f32.xlu0 %v1733
        %v1739 = vpop.xlane.xlu0 %1738
        %v1740 = vmul.f32 %v1737, %v1343
        %v1741 = vmul.f32 %v1739, %v1343
        %v1742 = vsub.f32 %v1732, %v1740
        %v1743 = vsub.f32 %v1733, %v1741
        %v1744 = vmul.f32 %v1742, %v1742
        %v1745 = vmul.f32 %v1743, %v1743
        %1746 = vadd.xlane.f32.xlu0 %v1744
        %v1747 = vpop.xlane.xlu0 %1746
        %1748 = vadd.xlane.f32.xlu0 %v1745
        %v1749 = vpop.xlane.xlu0 %1748
        %v1750 = vmul.f32 %v1747, %v1343
        %v1751 = vmul.f32 %v1749, %v1343
        %v1752 = vadd.f32 %v1750, 1e-05
        %v1753 = vadd.f32 %v1751, 1e-05
        %v1754 = vrsqrt.pop %v1752
        %v1755 = vmul.f32 %v1754, %v1752
        %v1756 = vmul.f32 %v1755, %v1754
        %v1757 = vmul.f32 0.5, %v1756
        %v1758 = vsub.f32 1.5, %v1757
        %v1759 = vmul.f32 %v1754, %v1758
        %vm1760 = vweird.f32 %v1752
        %vm1761 = vweird.f32 %v1754
        %vm1762 = vmor %vm1760, %vm1761
        %v1763 = vsel %vm1762, %v1754, %v1759
        %v1764 = vrsqrt.pop %v1753
        %v1765 = vmul.f32 %v1764, %v1753
        %v1766 = vmul.f32 %v1765, %v1764
        %v1767 = vmul.f32 0.5, %v1766
        %v1768 = vsub.f32 1.5, %v1767
        %v1769 = vmul.f32 %v1764, %v1768
        %vm1770 = vweird.f32 %v1753
        %vm1771 = vweird.f32 %v1764
        %vm1772 = vmor %vm1770, %vm1771
        %v1773 = vsel %vm1772, %v1764, %v1769
        %v1774 = vmul.f32 %v1742, %v1763
        %v1775 = vmul.f32 %v1743, %v1773
        %v1777 = vperm.slane %v1734, 0
        %v1779 = vmul.f32 %v1774, %v1777
        %v1780 = vmul.f32 %v1775, %v1777
        %v1782 = vperm.slane %v1735, 0
        %v1784 = vadd.f32 %v1779, %v1782
        %v1785 = vadd.f32 %v1780, %v1782
        %1786 = vst [vmem:[%s541] sm:$0xff] %v1784
        %1787 = vst [vmem:[%s541 + $0x8] sm:$0xff] %v1785
        %s1788 = sand.u32 %s319, 1
        %s1789 = scalar_lea.sflag [#allocation4], %s1788
        %s1790 = sand.u32 %s319, 1
        %s1791 = smul.addr %s1790, 16
        %s1792 = scalar_lea.vmem [#allocation13], %s1791
        // Predicated region
        $region97: #{tpu_custom_call.1} parent=71 // pred_check
          %p1793 = pneg %p329
        $region98: #{tpu_custom_call.1} parent=71 // pred_check_branch
          %1795 = sbr.rel (%p1793) target = $region100
        $region99: #{tpu_custom_call.1} parent=71 // pred_region
          %s1796 = smul.u32 2, %s33
          %1798 = vsyncadd %s1789, 0
          %s1799 = smul.addr %s1796, 8
          %s1800 = scalar_lea.hbm %s13, %s1799
          %s1801 = sshll.u32 %s1792, 4
          %s1802 = int_to_ptr.vmem [resolvable:$true] %s1801
          %s1803 = sshll.u32 %s1800, 4
          %s1804 = int_to_ptr.hbm [resolvable:$true] %s1803
          %1809 = dma.vmem_to_hbm [thread:$0]  %s1802, 256, %s1804, %s1789, 128, 128, 8
        $region100: #{tpu_custom_call.1} parent=71 // pred_fallthru
          _
      $region72: #{tpu_custom_call.1} parent=5 // pred_fallthru
        _
      %p1810 = scmp.le.s32.totalorder 2, %s28
      // Predicated region
      $region101: #{tpu_custom_call.1} parent=5 // pred_check
        %p1811 = pneg %p1810
      $region102: #{tpu_custom_call.1} parent=5 // pred_check_branch
        %1813 = sbr.rel (%p1811) target = $region104
      $region103: #{tpu_custom_call.1} parent=5 // pred_region
        %s1814 = ssub.s32 %s28, 2
        // Predicated region
        $region105: #{tpu_custom_call.1} parent=103 // pred_check
          %p1815 = pneg %p335
        $region106: #{tpu_custom_call.1} parent=103 // pred_check_branch
          %1817 = sbr.rel (%p1815) target = $region108
        $region107: #{tpu_custom_call.1} parent=103 // pred_region
          %s1818 = sand.u32 %s320, 1
          %s1819 = scalar_lea.sflag [#allocation4], %s1818
          %s1820 = sand.u32 %s320, 1
          %s1821 = smul.addr %s1820, 16
          %s1822 = scalar_lea.vmem [#allocation13], %s1821
          %1824 = dma.done %s1819, 256
        $region108: #{tpu_custom_call.1} parent=103 // pred_fallthru
          _
      $region104: #{tpu_custom_call.1} parent=5 // pred_fallthru
        _
    $region6: #{tpu_custom_call.1} parent=1 // loop_footer
      %s32 = sadd.s32 1, %s28
    $region7: #{tpu_custom_call.1} parent=1 // loop_footer_branch
      %27 = sbr.rel target = $region3
    $region8: #{tpu_custom_call.1} parent=1 // loop_exit
      _
    %1825 = vsyncpa [#allocation3], 1
    %s1826 = scalar_lea.sflag [#allocation3], 1
    %1827 = vsyncpa %s1826, 1
    %1828 = vsyncpa [#allocation6], 1
    %1829 = vsyncpa [#allocation9], 1
    %1830 = vsyncpa [#allocation12], 1
    %1831 = vsyncpa [#allocation4], 1
    %s1832 = scalar_lea.sflag [#allocation4], 1
    %1833 = vsyncpa %s1832, 1

</llo_original>
